<compile_context>
chip_gen: v7x
topology: tpu7x:2x2x1
jax: 0.10.0
libtpu: 0.0.40
codegen_flags: <defaults>
</compile_context>

<pallas_src>
import jax
import jax.numpy as jnp
from jax.experimental import pallas as pl
from jax.experimental.pallas import tpu as pltpu

N_INPUT = 172
NL1 = 200
NL2 = 200
N_OUTPUT = 4

# Lane/MXU-aligned padded sizes (zero padding => numerically exact).
IN_PAD = 256    # 172 -> 256  (K of first matmul)
HID_PAD = 256   # 200 -> 256  (K/N of hidden matmuls)
OUT_PAD = 128   # 4   -> 128  (lane-dense output stores)


def magnet_mlp_kernel(x_ref, w1_ref, b1_ref, w2_ref, b2_ref, w3_ref, b3_ref,
                      o_ref):
    """Whole MLP hot path on the MXU/VPU: 3 matmuls + biases + 2 ReLUs."""
    x = x_ref[...]
    h1 = jnp.dot(x, w1_ref[...], preferred_element_type=jnp.float32)
    h1 = jnp.maximum(h1 + b1_ref[...], 0.0)                      # ReLU
    h2 = jnp.dot(h1, w2_ref[...], preferred_element_type=jnp.float32)
    h2 = jnp.maximum(h2 + b2_ref[...], 0.0)                      # ReLU
    out = jnp.dot(h2, w3_ref[...], preferred_element_type=jnp.float32)
    o_ref[...] = (out + b3_ref[...]).astype(o_ref.dtype)


def _pad2(a, rows, cols):
    r, c = a.shape
    return jnp.pad(a, ((0, rows - r), (0, cols - c)))


def magnet_forward(x, params, *, batch_tile=512):
    """x: (B, 172) float32. Returns (B, 4) float32."""
    w1, b1, w2, b2, w3, b3 = params
    B = x.shape[0]

    n_tiles = pl.cdiv(B, batch_tile)
    B_pad = n_tiles * batch_tile

    # Zero-pad batch and feature/output dims (exact: padded rows/cols only
    # ever multiply zero weights / add zero biases, and are sliced away).
    x_p = jnp.pad(x.astype(jnp.float32),
                  ((0, B_pad - B), (0, IN_PAD - N_INPUT)))
    w1p = _pad2(w1, IN_PAD, HID_PAD)
    b1p = _pad2(b1, 1, HID_PAD)
    w2p = _pad2(w2, HID_PAD, HID_PAD)
    b2p = _pad2(b2, 1, HID_PAD)
    w3p = _pad2(w3, HID_PAD, OUT_PAD)
    b3p = _pad2(b3, 1, OUT_PAD)

    # Weights/biases: full-array blocks with constant index_map (resident,
    # not re-fetched per grid step).
    full = lambda shape: pl.BlockSpec(shape, lambda i: (0, 0))

    flops = 2 * B_pad * (IN_PAD * HID_PAD + HID_PAD * HID_PAD
                         + HID_PAD * OUT_PAD)
    bytes_accessed = 4 * (B_pad * (IN_PAD + OUT_PAD)
                          + IN_PAD * HID_PAD + HID_PAD * HID_PAD
                          + HID_PAD * OUT_PAD + 2 * HID_PAD + OUT_PAD)

    out_padded = pl.pallas_call(
        magnet_mlp_kernel,
        out_shape=jax.ShapeDtypeStruct((B_pad, OUT_PAD), jnp.float32),
        grid_spec=pltpu.PrefetchScalarGridSpec(
            num_scalar_prefetch=0,
            grid=(n_tiles,),
            in_specs=[
                pl.BlockSpec((batch_tile, IN_PAD), lambda i: (i, 0)),  # x
                full(w1p.shape),   # (256, 256)
                full(b1p.shape),   # (1, 256)
                full(w2p.shape),   # (256, 256)
                full(b2p.shape),   # (1, 256)
                full(w3p.shape),   # (256, 128)
                full(b3p.shape),   # (1, 128)
            ],
            out_specs=pl.BlockSpec((batch_tile, OUT_PAD), lambda i: (i, 0)),
        ),
        compiler_params=pltpu.CompilerParams(
            dimension_semantics=("parallel",),
            vmem_limit_bytes=32 * 1024 * 1024,
        ),
        cost_estimate=pl.CostEstimate(
            flops=flops, transcendentals=0, bytes_accessed=bytes_accessed),
    )(x_p, w1p, b1p, w2p, b2p, w3p, b3p)

    return out_padded[:B, :N_OUTPUT]


def init_params(key):
    """Deterministic PyTorch-style init: U(-1/sqrt(fan_in), 1/sqrt(fan_in))."""
    def linear_init(key, fan_in, fan_out):
        kw, kb = jax.random.split(key)
        bound = 1.0 / jnp.sqrt(jnp.float32(fan_in))
        w = jax.random.uniform(kw, (fan_in, fan_out), jnp.float32,
                               minval=-bound, maxval=bound)
        b = jax.random.uniform(kb, (1, fan_out), jnp.float32,
                               minval=-bound, maxval=bound)
        return w, b

    k1, k2, k3 = jax.random.split(key, 3)
    w1, b1 = linear_init(k1, N_INPUT, NL1)
    w2, b2 = linear_init(k2, NL1, NL2)
    w3, b3 = linear_init(k3, NL2, N_OUTPUT)
    return w1, b1, w2, b2, w3, b3


def magnet_reference(x, params):
    """Pure-JAX reference for correctness checking."""
    w1, b1, w2, b2, w3, b3 = params
    h1 = jnp.maximum(x @ w1 + b1, 0.0)
    h2 = jnp.maximum(h1 @ w2 + b2, 0.0)
    return h2 @ w3 + b3


if __name__ == "__main__":
    key = jax.random.PRNGKey(0)
    k_params, k_x = jax.random.split(key)

    params = init_params(k_params)
    batch = 16
    x = jax.random.normal(k_x, (batch, N_INPUT), jnp.float32)
    ref = magnet_reference(x, params)

    # Default (large) tile: batch is padded up to one tile, single grid step.
    out = magnet_forward(x, params)
    out = jax.block_until_ready(out)
    assert out.shape == (batch, N_OUTPUT)
    assert jnp.allclose(out, ref, atol=1e-4, rtol=1e-4), "mismatch (default tile)"

    # Small tile: exercises the multi-step (grid > 1) pipelined path.
    out2 = magnet_forward(x, params, batch_tile=8)
    out2 = jax.block_until_ready(out2)
    assert jnp.allclose(out2, ref, atol=1e-4, rtol=1e-4), "mismatch (small tile)"

    print("KERNEL_OK")
</pallas_src>

<mosaic_0001>
module attributes {stable_mosaic.version = 11 : i64} {
  func.func @magnet_mlp_kernel(%arg0: i32, %arg1: memref<512x256xf32, #tpu.memory_space<vmem>>, %arg2: memref<256x256xf32, #tpu.memory_space<vmem>>, %arg3: memref<1x256xf32, #tpu.memory_space<vmem>>, %arg4: memref<256x256xf32, #tpu.memory_space<vmem>>, %arg5: memref<1x256xf32, #tpu.memory_space<vmem>>, %arg6: memref<256x128xf32, #tpu.memory_space<vmem>>, %arg7: memref<1x128xf32, #tpu.memory_space<vmem>>, %arg8: memref<512x128xf32, #tpu.memory_space<vmem>>) attributes {dimension_semantics = [#tpu.dimension_semantics<parallel>], iteration_bounds = array<i64: 1>, scalar_prefetch = 0 : i64, scratch_operands = 0 : i64, tpu.core_type = #tpu.core_type<tc>, window_params = [{transform_indices = @transform_0, window_bounds = array<i64: 512, 256>}, {pipeline_mode = #tpu.pipeline_mode<synchronous>, transform_indices = @transform_1, window_bounds = array<i64: 256, 256>}, {pipeline_mode = #tpu.pipeline_mode<synchronous>, transform_indices = @transform_2, window_bounds = array<i64: 1, 256>}, {pipeline_mode = #tpu.pipeline_mode<synchronous>, transform_indices = @transform_3, window_bounds = array<i64: 256, 256>}, {pipeline_mode = #tpu.pipeline_mode<synchronous>, transform_indices = @transform_4, window_bounds = array<i64: 1, 256>}, {pipeline_mode = #tpu.pipeline_mode<synchronous>, transform_indices = @transform_5, window_bounds = array<i64: 256, 128>}, {pipeline_mode = #tpu.pipeline_mode<synchronous>, transform_indices = @transform_6, window_bounds = array<i64: 1, 128>}, {transform_indices = @transform_7, window_bounds = array<i64: 512, 128>}]} {
    %c0 = arith.constant 0 : index
    %c0_0 = arith.constant 0 : index
    %0 = vector.load %arg1[%c0, %c0_0] : memref<512x256xf32, #tpu.memory_space<vmem>>, vector<512x256xf32>
    %c0_1 = arith.constant 0 : index
    %c0_2 = arith.constant 0 : index
    %1 = vector.load %arg2[%c0_1, %c0_2] : memref<256x256xf32, #tpu.memory_space<vmem>>, vector<256x256xf32>
    %cst = arith.constant dense<0.000000e+00> : vector<512x256xf32>
    %2 = tpu.matmul %0, %1, %cst {dimension_numbers = #tpu.dot_dimension_numbers<[1], [0], [0], [1], [0, 0, 1, 1], [], []>} : vector<512x256xf32>, vector<256x256xf32>, vector<512x256xf32> -> vector<512x256xf32>
    %c0_3 = arith.constant 0 : index
    %c0_4 = arith.constant 0 : index
    %3 = vector.load %arg3[%c0_3, %c0_4] : memref<1x256xf32, #tpu.memory_space<vmem>>, vector<1x256xf32>
    %4 = vector.broadcast %3 : vector<1x256xf32> to vector<512x256xf32>
    %5 = arith.addf %2, %4 : vector<512x256xf32>
    %cst_5 = arith.constant 0.000000e+00 : f32
    %6 = vector.broadcast %cst_5 : f32 to vector<512x256xf32>
    %7 = arith.maximumf %5, %6 : vector<512x256xf32>
    %c0_6 = arith.constant 0 : index
    %c0_7 = arith.constant 0 : index
    %8 = vector.load %arg4[%c0_6, %c0_7] : memref<256x256xf32, #tpu.memory_space<vmem>>, vector<256x256xf32>
    %cst_8 = arith.constant dense<0.000000e+00> : vector<512x256xf32>
    %9 = tpu.matmul %7, %8, %cst_8 {dimension_numbers = #tpu.dot_dimension_numbers<[1], [0], [0], [1], [0, 0, 1, 1], [], []>} : vector<512x256xf32>, vector<256x256xf32>, vector<512x256xf32> -> vector<512x256xf32>
    %c0_9 = arith.constant 0 : index
    %c0_10 = arith.constant 0 : index
    %10 = vector.load %arg5[%c0_9, %c0_10] : memref<1x256xf32, #tpu.memory_space<vmem>>, vector<1x256xf32>
    %11 = vector.broadcast %10 : vector<1x256xf32> to vector<512x256xf32>
    %12 = arith.addf %9, %11 : vector<512x256xf32>
    %cst_11 = arith.constant 0.000000e+00 : f32
    %13 = vector.broadcast %cst_11 : f32 to vector<512x256xf32>
    %14 = arith.maximumf %12, %13 : vector<512x256xf32>
    %c0_12 = arith.constant 0 : index
    %c0_13 = arith.constant 0 : index
    %15 = vector.load %arg6[%c0_12, %c0_13] : memref<256x128xf32, #tpu.memory_space<vmem>>, vector<256x128xf32>
    %cst_14 = arith.constant dense<0.000000e+00> : vector<512x128xf32>
    %16 = tpu.matmul %14, %15, %cst_14 {dimension_numbers = #tpu.dot_dimension_numbers<[1], [0], [0], [1], [0, 0, 1, 1], [], []>} : vector<512x256xf32>, vector<256x128xf32>, vector<512x128xf32> -> vector<512x128xf32>
    %c0_15 = arith.constant 0 : index
    %c0_16 = arith.constant 0 : index
    %17 = vector.load %arg7[%c0_15, %c0_16] : memref<1x128xf32, #tpu.memory_space<vmem>>, vector<1x128xf32>
    %18 = vector.broadcast %17 : vector<1x128xf32> to vector<512x128xf32>
    %19 = arith.addf %16, %18 : vector<512x128xf32>
    %c0_17 = arith.constant 0 : index
    %c0_18 = arith.constant 0 : index
    %20 = vector.load %arg8[%c0_17, %c0_18] : memref<512x128xf32, #tpu.memory_space<vmem>>, vector<512x128xf32>
    tpu.vector_store %arg8[%c0_17, %c0_18], %19 {strides = array<i32>} : memref<512x128xf32, #tpu.memory_space<vmem>>, vector<512x128xf32>,
    return
  }
  func.func @transform_0(%arg0: i32) -> (i32, i32) {
    %c0_i32 = arith.constant 0 : i32
    %c0_i32_0 = arith.constant 0 : i32
    return %arg0, %c0_i32 : i32, i32
  }
  func.func @transform_1(%arg0: i32) -> (i32, i32) {
    %c0_i32 = arith.constant 0 : i32
    %c0_i32_0 = arith.constant 0 : i32
    %c0_i32_1 = arith.constant 0 : i32
    return %c0_i32, %c0_i32_0 : i32, i32
  }
  func.func @transform_2(%arg0: i32) -> (i32, i32) {
    %c0_i32 = arith.constant 0 : i32
    %c0_i32_0 = arith.constant 0 : i32
    %c0_i32_1 = arith.constant 0 : i32
    return %c0_i32, %c0_i32_0 : i32, i32
  }
  func.func @transform_3(%arg0: i32) -> (i32, i32) {
    %c0_i32 = arith.constant 0 : i32
    %c0_i32_0 = arith.constant 0 : i32
    %c0_i32_1 = arith.constant 0 : i32
    return %c0_i32, %c0_i32_0 : i32, i32
  }
  func.func @transform_4(%arg0: i32) -> (i32, i32) {
    %c0_i32 = arith.constant 0 : i32
    %c0_i32_0 = arith.constant 0 : i32
    %c0_i32_1 = arith.constant 0 : i32
    return %c0_i32, %c0_i32_0 : i32, i32
  }
  func.func @transform_5(%arg0: i32) -> (i32, i32) {
    %c0_i32 = arith.constant 0 : i32
    %c0_i32_0 = arith.constant 0 : i32
    %c0_i32_1 = arith.constant 0 : i32
    return %c0_i32, %c0_i32_0 : i32, i32
  }
  func.func @transform_6(%arg0: i32) -> (i32, i32) {
    %c0_i32 = arith.constant 0 : i32
    %c0_i32_0 = arith.constant 0 : i32
    %c0_i32_1 = arith.constant 0 : i32
    return %c0_i32, %c0_i32_0 : i32, i32
  }
  func.func @transform_7(%arg0: i32) -> (i32, i32) {
    %c0_i32 = arith.constant 0 : i32
    %c0_i32_0 = arith.constant 0 : i32
    return %arg0, %c0_i32 : i32, i32
  }
}

</mosaic_0001>

<llo_original>
// kernel: tpu_custom_call.1
$region0: #{tpu_custom_call.1}
  #allocation0 [shape = 'u32[]', space=smem, size = 0x4, offset = 0x4, fixed_abs, tag = 'smem constant byte address 0x4 - core index']
  #allocation1 [shape = 'u32[144,128]{1,0:T(1,128)}', space=vmem, size = 0x12000, scoped, tag = 'internal scratch']
  %s0 = inlined_call_operand.hbm [shape: f32[512,256], index: 0, kind: input, shape index: {}]
  %s1 = inlined_call_operand.hbm [shape: f32[256,256], index: 1, kind: input, shape index: {}]
  %s2 = inlined_call_operand.vmem [shape: f32[1,256], index: 2, kind: input, shape index: {}]
  %s3 = inlined_call_operand.hbm [shape: f32[256,256], index: 3, kind: input, shape index: {}]
  %s4 = inlined_call_operand.vmem [shape: f32[1,256], index: 4, kind: input, shape index: {}]
  %s5 = inlined_call_operand.hbm [shape: f32[256,128], index: 5, kind: input, shape index: {}]
  %s6 = inlined_call_operand.vmem [shape: f32[1,128], index: 6, kind: input, shape index: {}]
  %s7 = inlined_call_operand.hbm [shape: f32[512,128], index: 7, kind: output, shape index: {}]
  %s8 = sld [smem:[#allocation0]]
  $region54: #{tpu_custom_call.1} parent=0
    _
  %s10 = ssub.s32 1, %s8
  %s11 = scalar_select 0, %s10, %s8
  $region1: #{tpu_custom_call.1} parent=0
    #allocation2 [shape = 'u8[524288]{0}', space=vmem, size = 0x80000, scoped, tag = 'input window, operand 0, single buffered']
    #allocation3 [shape = 's32[1]{0}', space=sflag, size = 0x4, scoped, tag = 'scoped memory for tpu_custom_call.1']
    #allocation4 [shape = 's32[1]{0}', space=sflag, size = 0x4, scoped, tag = 'scoped memory for tpu_custom_call.1']
    #allocation5 [shape = 'u8[262144]{0}', space=vmem, size = 0x40000, scoped, tag = 'input window, operand 1, single buffered']
    #allocation6 [shape = 's32[1]{0}', space=sflag, size = 0x4, scoped, tag = 'scoped memory for tpu_custom_call.1']
    #allocation7 [shape = 'u8[262144]{0}', space=vmem, size = 0x40000, scoped, tag = 'input window, operand 3, single buffered']
    #allocation8 [shape = 'u8[131072]{0}', space=vmem, size = 0x20000, scoped, tag = 'input window, operand 5, single buffered']
    #allocation9 [shape = 's32[1]{0}', space=sflag, size = 0x4, scoped, tag = 'scoped memory for tpu_custom_call.1']
    #allocation10 [shape = 'u8[262144]{0}', space=vmem, size = 0x40000, scoped, tag = 'output window, operand 0, single buffered']
    %12 = vsyncpa [#allocation3], 0
    %13 = vsyncpa [#allocation6], 0
    %14 = vsyncpa [#allocation9], 0
    %15 = vsyncpa [#allocation4], 0
    // Predicated region
    $region2: #{tpu_custom_call.1} parent=1 // pred_check
      _
    $region3: #{tpu_custom_call.1} parent=1 // pred_check_branch
      %17 = sbr.rel (0) target = $region5
    $region4: #{tpu_custom_call.1} parent=1 // pred_region
      %s19 = ssub.s32 16384, 16384
      %20 = vsyncadd [#allocation3], %s19
      %s21 = sshll.u32 [#allocation2], 4
      %s22 = int_to_ptr.vmem [resolvable:$true] %s21
      %27 = dma.hbm_to_vmem [thread:$0]  %s0, 16384, %s22, [#allocation3], 256, 256, 16
    $region5: #{tpu_custom_call.1} parent=1 // pred_fallthru
      _
    // Predicated region
    $region6: #{tpu_custom_call.1} parent=1 // pred_check
      _
    $region7: #{tpu_custom_call.1} parent=1 // pred_check_branch
      %29 = sbr.rel (0) target = $region9
    $region8: #{tpu_custom_call.1} parent=1 // pred_region
      %s31 = ssub.s32 8192, 8192
      %32 = vsyncadd [#allocation6], %s31
      %s33 = sshll.u32 [#allocation5], 4
      %s34 = int_to_ptr.vmem [resolvable:$true] %s33
      %39 = dma.hbm_to_vmem [thread:$0]  %s1, 8192, %s34, [#allocation6], 256, 256, 16
    $region9: #{tpu_custom_call.1} parent=1 // pred_fallthru
      _
    // Predicated region
    $region10: #{tpu_custom_call.1} parent=1 // pred_check
      _
    $region11: #{tpu_custom_call.1} parent=1 // pred_check_branch
      %41 = sbr.rel (0) target = $region13
    $region12: #{tpu_custom_call.1} parent=1 // pred_region
      _
    $region13: #{tpu_custom_call.1} parent=1 // pred_fallthru
      _
    // Predicated region
    $region14: #{tpu_custom_call.1} parent=1 // pred_check
      _
    $region15: #{tpu_custom_call.1} parent=1 // pred_check_branch
      %43 = sbr.rel (0) target = $region17
    $region16: #{tpu_custom_call.1} parent=1 // pred_region
      %s45 = ssub.s32 8192, 8192
      %46 = vsyncadd [#allocation6], %s45
      %s47 = sshll.u32 [#allocation7], 4
      %s48 = int_to_ptr.vmem [resolvable:$true] %s47
      %53 = dma.hbm_to_vmem [thread:$0]  %s3, 8192, %s48, [#allocation6], 256, 256, 16
    $region17: #{tpu_custom_call.1} parent=1 // pred_fallthru
      _
    // Predicated region
    $region18: #{tpu_custom_call.1} parent=1 // pred_check
      _
    $region19: #{tpu_custom_call.1} parent=1 // pred_check_branch
      %55 = sbr.rel (0) target = $region21
    $region20: #{tpu_custom_call.1} parent=1 // pred_region
      _
    $region21: #{tpu_custom_call.1} parent=1 // pred_fallthru
      _
    // Predicated region
    $region22: #{tpu_custom_call.1} parent=1 // pred_check
      _
    $region23: #{tpu_custom_call.1} parent=1 // pred_check_branch
      %57 = sbr.rel (0) target = $region25
    $region24: #{tpu_custom_call.1} parent=1 // pred_region
      %s59 = ssub.s32 4096, 4096
      %60 = vsyncadd [#allocation9], %s59
      %s61 = sshll.u32 [#allocation8], 4
      %s62 = int_to_ptr.vmem [resolvable:$true] %s61
      %67 = dma.hbm_to_vmem [thread:$0]  %s5, 4096, %s62, [#allocation9], 128, 128, 8
    $region25: #{tpu_custom_call.1} parent=1 // pred_fallthru
      _
    // Predicated region
    $region26: #{tpu_custom_call.1} parent=1 // pred_check
      _
    $region27: #{tpu_custom_call.1} parent=1 // pred_check_branch
      %69 = sbr.rel (0) target = $region29
    $region28: #{tpu_custom_call.1} parent=1 // pred_region
      _
    $region29: #{tpu_custom_call.1} parent=1 // pred_fallthru
      _
    // Predicated region
    $region30: #{tpu_custom_call.1} parent=1 // pred_check
      _
    $region31: #{tpu_custom_call.1} parent=1 // pred_check_branch
      %71 = sbr.rel (0) target = $region33
    $region32: #{tpu_custom_call.1} parent=1 // pred_region
      %72 = dma.done [#allocation3], 16384
    $region33: #{tpu_custom_call.1} parent=1 // pred_fallthru
      _
    // Predicated region
    $region34: #{tpu_custom_call.1} parent=1 // pred_check
      _
    $region35: #{tpu_custom_call.1} parent=1 // pred_check_branch
      %74 = sbr.rel (0) target = $region37
    $region36: #{tpu_custom_call.1} parent=1 // pred_region
      %75 = dma.done [#allocation6], 8192
    $region37: #{tpu_custom_call.1} parent=1 // pred_fallthru
      _
    // Predicated region
    $region38: #{tpu_custom_call.1} parent=1 // pred_check
      _
    $region39: #{tpu_custom_call.1} parent=1 // pred_check_branch
      %77 = sbr.rel (0) target = $region41
    $region40: #{tpu_custom_call.1} parent=1 // pred_region
      %78 = dma.done [#allocation6], 8192
    $region41: #{tpu_custom_call.1} parent=1 // pred_fallthru
      _
    // Predicated region
    $region42: #{tpu_custom_call.1} parent=1 // pred_check
      _
    $region43: #{tpu_custom_call.1} parent=1 // pred_check_branch
      %80 = sbr.rel (0) target = $region45
    $region44: #{tpu_custom_call.1} parent=1 // pred_region
      %81 = dma.done [#allocation9], 4096
    $region45: #{tpu_custom_call.1} parent=1 // pred_fallthru
      _
    %v82 = vld [vmem:[#allocation2] sm:$0xff]
    %v83 = vld [vmem:[#allocation2 + $0x8] sm:$0xff]
    %v84 = vld [vmem:[#allocation2 + $0x10] sm:$0xff]
    %v85 = vld [vmem:[#allocation2 + $0x18] sm:$0xff]
    %v86 = vld [vmem:[#allocation2 + $0x20] sm:$0xff]
    %v87 = vld [vmem:[#allocation2 + $0x28] sm:$0xff]
    %v88 = vld [vmem:[#allocation2 + $0x30] sm:$0xff]
    %v89 = vld [vmem:[#allocation2 + $0x38] sm:$0xff]
    %v90 = vld [vmem:[#allocation2 + $0x40] sm:$0xff]
    %v91 = vld [vmem:[#allocation2 + $0x48] sm:$0xff]
    %v92 = vld [vmem:[#allocation2 + $0x50] sm:$0xff]
    %v93 = vld [vmem:[#allocation2 + $0x58] sm:$0xff]
    %v94 = vld [vmem:[#allocation2 + $0x60] sm:$0xff]
    %v95 = vld [vmem:[#allocation2 + $0x68] sm:$0xff]
    %v96 = vld [vmem:[#allocation2 + $0x70] sm:$0xff]
    %v97 = vld [vmem:[#allocation2 + $0x78] sm:$0xff]
    %v98 = vld [vmem:[#allocation2 + $0x80] sm:$0xff]
    %v99 = vld [vmem:[#allocation2 + $0x88] sm:$0xff]
    %v100 = vld [vmem:[#allocation2 + $0x90] sm:$0xff]
    %v101 = vld [vmem:[#allocation2 + $0x98] sm:$0xff]
    %v102 = vld [vmem:[#allocation2 + $0xa0] sm:$0xff]
    %v103 = vld [vmem:[#allocation2 + $0xa8] sm:$0xff]
    %v104 = vld [vmem:[#allocation2 + $0xb0] sm:$0xff]
    %v105 = vld [vmem:[#allocation2 + $0xb8] sm:$0xff]
    %v106 = vld [vmem:[#allocation2 + $0xc0] sm:$0xff]
    %v107 = vld [vmem:[#allocation2 + $0xc8] sm:$0xff]
    %v108 = vld [vmem:[#allocation2 + $0xd0] sm:$0xff]
    %v109 = vld [vmem:[#allocation2 + $0xd8] sm:$0xff]
    %v110 = vld [vmem:[#allocation2 + $0xe0] sm:$0xff]
    %v111 = vld [vmem:[#allocation2 + $0xe8] sm:$0xff]
    %v112 = vld [vmem:[#allocation2 + $0xf0] sm:$0xff]
    %v113 = vld [vmem:[#allocation2 + $0xf8] sm:$0xff]
    %v114 = vld [vmem:[#allocation2 + $0x100] sm:$0xff]
    %v115 = vld [vmem:[#allocation2 + $0x108] sm:$0xff]
    %v116 = vld [vmem:[#allocation2 + $0x110] sm:$0xff]
    %v117 = vld [vmem:[#allocation2 + $0x118] sm:$0xff]
    %v118 = vld [vmem:[#allocation2 + $0x120] sm:$0xff]
    %v119 = vld [vmem:[#allocation2 + $0x128] sm:$0xff]
    %v120 = vld [vmem:[#allocation2 + $0x130] sm:$0xff]
    %v121 = vld [vmem:[#allocation2 + $0x138] sm:$0xff]
    %v122 = vld [vmem:[#allocation2 + $0x140] sm:$0xff]
    %v123 = vld [vmem:[#allocation2 + $0x148] sm:$0xff]
    %v124 = vld [vmem:[#allocation2 + $0x150] sm:$0xff]
    %v125 = vld [vmem:[#allocation2 + $0x158] sm:$0xff]
    %v126 = vld [vmem:[#allocation2 + $0x160] sm:$0xff]
    %v127 = vld [vmem:[#allocation2 + $0x168] sm:$0xff]
    %v128 = vld [vmem:[#allocation2 + $0x170] sm:$0xff]
    %v129 = vld [vmem:[#allocation2 + $0x178] sm:$0xff]
    %v130 = vld [vmem:[#allocation2 + $0x180] sm:$0xff]
    %v131 = vld [vmem:[#allocation2 + $0x188] sm:$0xff]
    %v132 = vld [vmem:[#allocation2 + $0x190] sm:$0xff]
    %v133 = vld [vmem:[#allocation2 + $0x198] sm:$0xff]
    %v134 = vld [vmem:[#allocation2 + $0x1a0] sm:$0xff]
    %v135 = vld [vmem:[#allocation2 + $0x1a8] sm:$0xff]
    %v136 = vld [vmem:[#allocation2 + $0x1b0] sm:$0xff]
    %v137 = vld [vmem:[#allocation2 + $0x1b8] sm:$0xff]
    %v138 = vld [vmem:[#allocation2 + $0x1c0] sm:$0xff]
    %v139 = vld [vmem:[#allocation2 + $0x1c8] sm:$0xff]
    %v140 = vld [vmem:[#allocation2 + $0x1d0] sm:$0xff]
    %v141 = vld [vmem:[#allocation2 + $0x1d8] sm:$0xff]
    %v142 = vld [vmem:[#allocation2 + $0x1e0] sm:$0xff]
    %v143 = vld [vmem:[#allocation2 + $0x1e8] sm:$0xff]
    %v144 = vld [vmem:[#allocation2 + $0x1f0] sm:$0xff]
    %v145 = vld [vmem:[#allocation2 + $0x1f8] sm:$0xff]
    %v146 = vld [vmem:[#allocation2 + $0x200] sm:$0xff]
    %v147 = vld [vmem:[#allocation2 + $0x208] sm:$0xff]
    %v148 = vld [vmem:[#allocation2 + $0x210] sm:$0xff]
    %v149 = vld [vmem:[#allocation2 + $0x218] sm:$0xff]
    %v150 = vld [vmem:[#allocation2 + $0x220] sm:$0xff]
    %v151 = vld [vmem:[#allocation2 + $0x228] sm:$0xff]
    %v152 = vld [vmem:[#allocation2 + $0x230] sm:$0xff]
    %v153 = vld [vmem:[#allocation2 + $0x238] sm:$0xff]
    %v154 = vld [vmem:[#allocation2 + $0x240] sm:$0xff]
    %v155 = vld [vmem:[#allocation2 + $0x248] sm:$0xff]
    %v156 = vld [vmem:[#allocation2 + $0x250] sm:$0xff]
    %v157 = vld [vmem:[#allocation2 + $0x258] sm:$0xff]
    %v158 = vld [vmem:[#allocation2 + $0x260] sm:$0xff]
    %v159 = vld [vmem:[#allocation2 + $0x268] sm:$0xff]
    %v160 = vld [vmem:[#allocation2 + $0x270] sm:$0xff]
    %v161 = vld [vmem:[#allocation2 + $0x278] sm:$0xff]
    %v162 = vld [vmem:[#allocation2 + $0x280] sm:$0xff]
    %v163 = vld [vmem:[#allocation2 + $0x288] sm:$0xff]
    %v164 = vld [vmem:[#allocation2 + $0x290] sm:$0xff]
    %v165 = vld [vmem:[#allocation2 + $0x298] sm:$0xff]
    %v166 = vld [vmem:[#allocation2 + $0x2a0] sm:$0xff]
    %v167 = vld [vmem:[#allocation2 + $0x2a8] sm:$0xff]
    %v168 = vld [vmem:[#allocation2 + $0x2b0] sm:$0xff]
    %v169 = vld [vmem:[#allocation2 + $0x2b8] sm:$0xff]
    %v170 = vld [vmem:[#allocation2 + $0x2c0] sm:$0xff]
    %v171 = vld [vmem:[#allocation2 + $0x2c8] sm:$0xff]
    %v172 = vld [vmem:[#allocation2 + $0x2d0] sm:$0xff]
    %v173 = vld [vmem:[#allocation2 + $0x2d8] sm:$0xff]
    %v174 = vld [vmem:[#allocation2 + $0x2e0] sm:$0xff]
    %v175 = vld [vmem:[#allocation2 + $0x2e8] sm:$0xff]
    %v176 = vld [vmem:[#allocation2 + $0x2f0] sm:$0xff]
    %v177 = vld [vmem:[#allocation2 + $0x2f8] sm:$0xff]
    %v178 = vld [vmem:[#allocation2 + $0x300] sm:$0xff]
    %v179 = vld [vmem:[#allocation2 + $0x308] sm:$0xff]
    %v180 = vld [vmem:[#allocation2 + $0x310] sm:$0xff]
    %v181 = vld [vmem:[#allocation2 + $0x318] sm:$0xff]
    %v182 = vld [vmem:[#allocation2 + $0x320] sm:$0xff]
    %v183 = vld [vmem:[#allocation2 + $0x328] sm:$0xff]
    %v184 = vld [vmem:[#allocation2 + $0x330] sm:$0xff]
    %v185 = vld [vmem:[#allocation2 + $0x338] sm:$0xff]
    %v186 = vld [vmem:[#allocation2 + $0x340] sm:$0xff]
    %v187 = vld [vmem:[#allocation2 + $0x348] sm:$0xff]
    %v188 = vld [vmem:[#allocation2 + $0x350] sm:$0xff]
    %v189 = vld [vmem:[#allocation2 + $0x358] sm:$0xff]
    %v190 = vld [vmem:[#allocation2 + $0x360] sm:$0xff]
    %v191 = vld [vmem:[#allocation2 + $0x368] sm:$0xff]
    %v192 = vld [vmem:[#allocation2 + $0x370] sm:$0xff]
    %v193 = vld [vmem:[#allocation2 + $0x378] sm:$0xff]
    %v194 = vld [vmem:[#allocation2 + $0x380] sm:$0xff]
    %v195 = vld [vmem:[#allocation2 + $0x388] sm:$0xff]
    %v196 = vld [vmem:[#allocation2 + $0x390] sm:$0xff]
    %v197 = vld [vmem:[#allocation2 + $0x398] sm:$0xff]
    %v198 = vld [vmem:[#allocation2 + $0x3a0] sm:$0xff]
    %v199 = vld [vmem:[#allocation2 + $0x3a8] sm:$0xff]
    %v200 = vld [vmem:[#allocation2 + $0x3b0] sm:$0xff]
    %v201 = vld [vmem:[#allocation2 + $0x3b8] sm:$0xff]
    %v202 = vld [vmem:[#allocation2 + $0x3c0] sm:$0xff]
    %v203 = vld [vmem:[#allocation2 + $0x3c8] sm:$0xff]
    %v204 = vld [vmem:[#allocation2 + $0x3d0] sm:$0xff]
    %v205 = vld [vmem:[#allocation2 + $0x3d8] sm:$0xff]
    %v206 = vld [vmem:[#allocation2 + $0x3e0] sm:$0xff]
    %v207 = vld [vmem:[#allocation2 + $0x3e8] sm:$0xff]
    %v208 = vld [vmem:[#allocation2 + $0x3f0] sm:$0xff]
    %v209 = vld [vmem:[#allocation2 + $0x3f8] sm:$0xff]
    %v210 = vld [vmem:[#allocation5] sm:$0xff]
    %v211 = vld [vmem:[#allocation5 + $0x8] sm:$0xff]
    %v212 = vld [vmem:[#allocation5 + $0x10] sm:$0xff]
    %v213 = vld [vmem:[#allocation5 + $0x18] sm:$0xff]
    %v214 = vld [vmem:[#allocation5 + $0x20] sm:$0xff]
    %v215 = vld [vmem:[#allocation5 + $0x28] sm:$0xff]
    %v216 = vld [vmem:[#allocation5 + $0x30] sm:$0xff]
    %v217 = vld [vmem:[#allocation5 + $0x38] sm:$0xff]
    %v218 = vld [vmem:[#allocation5 + $0x40] sm:$0xff]
    %v219 = vld [vmem:[#allocation5 + $0x48] sm:$0xff]
    %v220 = vld [vmem:[#allocation5 + $0x50] sm:$0xff]
    %v221 = vld [vmem:[#allocation5 + $0x58] sm:$0xff]
    %v222 = vld [vmem:[#allocation5 + $0x60] sm:$0xff]
    %v223 = vld [vmem:[#allocation5 + $0x68] sm:$0xff]
    %v224 = vld [vmem:[#allocation5 + $0x70] sm:$0xff]
    %v225 = vld [vmem:[#allocation5 + $0x78] sm:$0xff]
    %v226 = vld [vmem:[#allocation5 + $0x80] sm:$0xff]
    %v227 = vld [vmem:[#allocation5 + $0x88] sm:$0xff]
    %v228 = vld [vmem:[#allocation5 + $0x90] sm:$0xff]
    %v229 = vld [vmem:[#allocation5 + $0x98] sm:$0xff]
    %v230 = vld [vmem:[#allocation5 + $0xa0] sm:$0xff]
    %v231 = vld [vmem:[#allocation5 + $0xa8] sm:$0xff]
    %v232 = vld [vmem:[#allocation5 + $0xb0] sm:$0xff]
    %v233 = vld [vmem:[#allocation5 + $0xb8] sm:$0xff]
    %v234 = vld [vmem:[#allocation5 + $0xc0] sm:$0xff]
    %v235 = vld [vmem:[#allocation5 + $0xc8] sm:$0xff]
    %v236 = vld [vmem:[#allocation5 + $0xd0] sm:$0xff]
    %v237 = vld [vmem:[#allocation5 + $0xd8] sm:$0xff]
    %v238 = vld [vmem:[#allocation5 + $0xe0] sm:$0xff]
    %v239 = vld [vmem:[#allocation5 + $0xe8] sm:$0xff]
    %v240 = vld [vmem:[#allocation5 + $0xf0] sm:$0xff]
    %v241 = vld [vmem:[#allocation5 + $0xf8] sm:$0xff]
    %v242 = vld [vmem:[#allocation5 + $0x100] sm:$0xff]
    %v243 = vld [vmem:[#allocation5 + $0x108] sm:$0xff]
    %v244 = vld [vmem:[#allocation5 + $0x110] sm:$0xff]
    %v245 = vld [vmem:[#allocation5 + $0x118] sm:$0xff]
    %v246 = vld [vmem:[#allocation5 + $0x120] sm:$0xff]
    %v247 = vld [vmem:[#allocation5 + $0x128] sm:$0xff]
    %v248 = vld [vmem:[#allocation5 + $0x130] sm:$0xff]
    %v249 = vld [vmem:[#allocation5 + $0x138] sm:$0xff]
    %v250 = vld [vmem:[#allocation5 + $0x140] sm:$0xff]
    %v251 = vld [vmem:[#allocation5 + $0x148] sm:$0xff]
    %v252 = vld [vmem:[#allocation5 + $0x150] sm:$0xff]
    %v253 = vld [vmem:[#allocation5 + $0x158] sm:$0xff]
    %v254 = vld [vmem:[#allocation5 + $0x160] sm:$0xff]
    %v255 = vld [vmem:[#allocation5 + $0x168] sm:$0xff]
    %v256 = vld [vmem:[#allocation5 + $0x170] sm:$0xff]
    %v257 = vld [vmem:[#allocation5 + $0x178] sm:$0xff]
    %v258 = vld [vmem:[#allocation5 + $0x180] sm:$0xff]
    %v259 = vld [vmem:[#allocation5 + $0x188] sm:$0xff]
    %v260 = vld [vmem:[#allocation5 + $0x190] sm:$0xff]
    %v261 = vld [vmem:[#allocation5 + $0x198] sm:$0xff]
    %v262 = vld [vmem:[#allocation5 + $0x1a0] sm:$0xff]
    %v263 = vld [vmem:[#allocation5 + $0x1a8] sm:$0xff]
    %v264 = vld [vmem:[#allocation5 + $0x1b0] sm:$0xff]
    %v265 = vld [vmem:[#allocation5 + $0x1b8] sm:$0xff]
    %v266 = vld [vmem:[#allocation5 + $0x1c0] sm:$0xff]
    %v267 = vld [vmem:[#allocation5 + $0x1c8] sm:$0xff]
    %v268 = vld [vmem:[#allocation5 + $0x1d0] sm:$0xff]
    %v269 = vld [vmem:[#allocation5 + $0x1d8] sm:$0xff]
    %v270 = vld [vmem:[#allocation5 + $0x1e0] sm:$0xff]
    %v271 = vld [vmem:[#allocation5 + $0x1e8] sm:$0xff]
    %v272 = vld [vmem:[#allocation5 + $0x1f0] sm:$0xff]
    %v273 = vld [vmem:[#allocation5 + $0x1f8] sm:$0xff]
    %v274 = vld [vmem:[%s2] sm:$0x3]
    %v276 = vlaneseq
    %v277 = vshrl.u32 %v276, 7
    %v278 = vsub.s32 0, %v277
    %v279 = vrot.slane %v274, %v278
    %v280 = vlaneseq
    %v281 = vshrl.u32 %v280, 7
    %v282 = vsub.s32 1, %v281
    %v283 = vrot.slane %v274, %v282
    %286 = vmatprep.subr.mxu0 %v211
    %287 = vmatpush1.msra.mxu0 %v210
    %288 = vmatprep.subr.mxu0 %v213
    %289 = vmatpush1.msra.mxu0 %v212
    %290 = vmatprep.subr.mxu0 %v215
    %291 = vmatpush1.msra.mxu0 %v214
    %292 = vmatprep.subr.mxu0 %v217
    %293 = vmatpush1.msra.mxu0 %v216
    %294 = vmatprep.subr.mxu0 %v219
    %295 = vmatpush1.msra.mxu0 %v218
    %296 = vmatprep.subr.mxu0 %v221
    %297 = vmatpush1.msra.mxu0 %v220
    %298 = vmatprep.subr.mxu0 %v223
    %299 = vmatpush1.msra.mxu0 %v222
    %300 = vmatprep.subr.mxu0 %v225
    %301 = vmatpush1.msra.mxu0 %v224
    %302 = vmatprep.subr.mxu0 %v227
    %303 = vmatpush1.msra.mxu0 %v226
    %304 = vmatprep.subr.mxu0 %v229
    %305 = vmatpush1.msra.mxu0 %v228
    %306 = vmatprep.subr.mxu0 %v231
    %307 = vmatpush1.msra.mxu0 %v230
    %308 = vmatprep.subr.mxu0 %v233
    %309 = vmatpush1.msra.mxu0 %v232
    %310 = vmatprep.subr.mxu0 %v235
    %311 = vmatpush1.msra.mxu0 %v234
    %312 = vmatprep.subr.mxu0 %v237
    %313 = vmatpush1.msra.mxu0 %v236
    %314 = vmatprep.subr.mxu0 %v239
    %315 = vmatpush1.msra.mxu0 %v238
    %316 = vmatprep.subr.mxu0 %v241
    %317 = vmatpush1.msra.mxu0 %v240
    %318 = vmatprep.subr.mxu0 %v243
    %319 = vmatpush1.msra.mxu0 %v242
    %320 = vmatprep.subr.mxu0 %v245
    %321 = vmatpush1.msra.mxu0 %v244
    %322 = vmatprep.subr.mxu0 %v247
    %323 = vmatpush1.msra.mxu0 %v246
    %324 = vmatprep.subr.mxu0 %v249
    %325 = vmatpush1.msra.mxu0 %v248
    %326 = vmatprep.subr.mxu0 %v251
    %327 = vmatpush1.msra.mxu0 %v250
    %328 = vmatprep.subr.mxu0 %v253
    %329 = vmatpush1.msra.mxu0 %v252
    %330 = vmatprep.subr.mxu0 %v255
    %331 = vmatpush1.msra.mxu0 %v254
    %332 = vmatprep.subr.mxu0 %v257
    %333 = vmatpush1.msra.mxu0 %v256
    %334 = vmatprep.subr.mxu0 %v259
    %335 = vmatpush1.msra.mxu0 %v258
    %336 = vmatprep.subr.mxu0 %v261
    %337 = vmatpush1.msra.mxu0 %v260
    %338 = vmatprep.subr.mxu0 %v263
    %339 = vmatpush1.msra.mxu0 %v262
    %340 = vmatprep.subr.mxu0 %v265
    %341 = vmatpush1.msra.mxu0 %v264
    %342 = vmatprep.subr.mxu0 %v267
    %343 = vmatpush1.msra.mxu0 %v266
    %344 = vmatprep.subr.mxu0 %v269
    %345 = vmatpush1.msra.mxu0 %v268
    %346 = vmatprep.subr.mxu0 %v271
    %347 = vmatpush1.msra.mxu0 %v270
    %348 = vmatprep.subr.mxu0 %v273
    %349 = vmatpush1.msra.mxu0 %v272
    %350 = vmatprep.mubr.f32.mxu0 %v83
    %351 = vmatmul.mubr.f32.gmra.mrb[0].mxu0 %v82
    %v352 = vpop.f32.mrb[0].mxu0
    %v353 = vadd.f32 %v279, %v352
    %v354 = vpop.f32.mrb[0].mxu0
    %v355 = vadd.f32 %v283, %v354
    %356 = vmatprep.mubr.f32.mxu0 %v85
    %357 = vmatmul.mubr.f32.gmra.mrb[0].mxu0 %v84
    %v358 = vpop.f32.mrb[0].mxu0
    %v359 = vadd.f32 %v279, %v358
    %v360 = vpop.f32.mrb[0].mxu0
    %v361 = vadd.f32 %v283, %v360
    %362 = vmatprep.mubr.f32.mxu0 %v87
    %363 = vmatmul.mubr.f32.gmra.mrb[0].mxu0 %v86
    %v364 = vpop.f32.mrb[0].mxu0
    %v365 = vadd.f32 %v279, %v364
    %v366 = vpop.f32.mrb[0].mxu0
    %v367 = vadd.f32 %v283, %v366
    %368 = vmatprep.mubr.f32.mxu0 %v89
    %369 = vmatmul.mubr.f32.gmra.mrb[0].mxu0 %v88
    %v370 = vpop.f32.mrb[0].mxu0
    %v371 = vadd.f32 %v279, %v370
    %v372 = vpop.f32.mrb[0].mxu0
    %v373 = vadd.f32 %v283, %v372
    %374 = vmatprep.mubr.f32.mxu0 %v91
    %375 = vmatmul.mubr.f32.gmra.mrb[0].mxu0 %v90
    %v376 = vpop.f32.mrb[0].mxu0
    %v377 = vadd.f32 %v279, %v376
    %v378 = vpop.f32.mrb[0].mxu0
    %v379 = vadd.f32 %v283, %v378
    %380 = vmatprep.mubr.f32.mxu0 %v93
    %381 = vmatmul.mubr.f32.gmra.mrb[0].mxu0 %v92
    %v382 = vpop.f32.mrb[0].mxu0
    %v383 = vadd.f32 %v279, %v382
    %v384 = vpop.f32.mrb[0].mxu0
    %v385 = vadd.f32 %v283, %v384
    %386 = vmatprep.mubr.f32.mxu0 %v95
    %387 = vmatmul.mubr.f32.gmra.mrb[0].mxu0 %v94
    %v388 = vpop.f32.mrb[0].mxu0
    %v389 = vadd.f32 %v279, %v388
    %v390 = vpop.f32.mrb[0].mxu0
    %v391 = vadd.f32 %v283, %v390
    %392 = vmatprep.mubr.f32.mxu0 %v97
    %393 = vmatmul.mubr.f32.gmra.mrb[0].mxu0 %v96
    %v394 = vpop.f32.mrb[0].mxu0
    %v395 = vadd.f32 %v279, %v394
    %v396 = vpop.f32.mrb[0].mxu0
    %v397 = vadd.f32 %v283, %v396
    %398 = vmatprep.mubr.f32.mxu0 %v99
    %399 = vmatmul.mubr.f32.gmra.mrb[0].mxu0 %v98
    %v400 = vpop.f32.mrb[0].mxu0
    %v401 = vadd.f32 %v279, %v400
    %v402 = vpop.f32.mrb[0].mxu0
    %v403 = vadd.f32 %v283, %v402
    %404 = vmatprep.mubr.f32.mxu0 %v101
    %405 = vmatmul.mubr.f32.gmra.mrb[0].mxu0 %v100
    %v406 = vpop.f32.mrb[0].mxu0
    %v407 = vadd.f32 %v279, %v406
    %v408 = vpop.f32.mrb[0].mxu0
    %v409 = vadd.f32 %v283, %v408
    %410 = vmatprep.mubr.f32.mxu0 %v103
    %411 = vmatmul.mubr.f32.gmra.mrb[0].mxu0 %v102
    %v412 = vpop.f32.mrb[0].mxu0
    %v413 = vadd.f32 %v279, %v412
    %v414 = vpop.f32.mrb[0].mxu0
    %v415 = vadd.f32 %v283, %v414
    %416 = vmatprep.mubr.f32.mxu0 %v105
    %417 = vmatmul.mubr.f32.gmra.mrb[0].mxu0 %v104
    %v418 = vpop.f32.mrb[0].mxu0
    %v419 = vadd.f32 %v279, %v418
    %v420 = vpop.f32.mrb[0].mxu0
    %v421 = vadd.f32 %v283, %v420
    %422 = vmatprep.mubr.f32.mxu0 %v107
    %423 = vmatmul.mubr.f32.gmra.mrb[0].mxu0 %v106
    %v424 = vpop.f32.mrb[0].mxu0
    %v425 = vadd.f32 %v279, %v424
    %v426 = vpop.f32.mrb[0].mxu0
    %v427 = vadd.f32 %v283, %v426
    %428 = vmatprep.mubr.f32.mxu0 %v109
    %429 = vmatmul.mubr.f32.gmra.mrb[0].mxu0 %v108
    %v430 = vpop.f32.mrb[0].mxu0
    %v431 = vadd.f32 %v279, %v430
    %v432 = vpop.f32.mrb[0].mxu0
    %v433 = vadd.f32 %v283, %v432
    %434 = vmatprep.mubr.f32.mxu0 %v111
    %435 = vmatmul.mubr.f32.gmra.mrb[0].mxu0 %v110
    %v436 = vpop.f32.mrb[0].mxu0
    %v437 = vadd.f32 %v279, %v436
    %v438 = vpop.f32.mrb[0].mxu0
    %v439 = vadd.f32 %v283, %v438
    %440 = vmatprep.mubr.f32.mxu0 %v113
    %441 = vmatmul.mubr.f32.gmra.mrb[0].mxu0 %v112
    %v442 = vpop.f32.mrb[0].mxu0
    %v443 = vadd.f32 %v279, %v442
    %v444 = vpop.f32.mrb[0].mxu0
    %v445 = vadd.f32 %v283, %v444
    %446 = vmatprep.mubr.f32.mxu0 %v115
    %447 = vmatmul.mubr.f32.gmra.mrb[0].mxu0 %v114
    %v448 = vpop.f32.mrb[0].mxu0
    %v449 = vadd.f32 %v279, %v448
    %v450 = vpop.f32.mrb[0].mxu0
    %v451 = vadd.f32 %v283, %v450
    %452 = vmatprep.mubr.f32.mxu0 %v117
    %453 = vmatmul.mubr.f32.gmra.mrb[0].mxu0 %v116
    %v454 = vpop.f32.mrb[0].mxu0
    %v455 = vadd.f32 %v279, %v454
    %v456 = vpop.f32.mrb[0].mxu0
    %v457 = vadd.f32 %v283, %v456
    %458 = vmatprep.mubr.f32.mxu0 %v119
    %459 = vmatmul.mubr.f32.gmra.mrb[0].mxu0 %v118
    %v460 = vpop.f32.mrb[0].mxu0
    %v461 = vadd.f32 %v279, %v460
    %v462 = vpop.f32.mrb[0].mxu0
    %v463 = vadd.f32 %v283, %v462
    %464 = vmatprep.mubr.f32.mxu0 %v121
    %465 = vmatmul.mubr.f32.gmra.mrb[0].mxu0 %v120
    %v466 = vpop.f32.mrb[0].mxu0
    %v467 = vadd.f32 %v279, %v466
    %v468 = vpop.f32.mrb[0].mxu0
    %v469 = vadd.f32 %v283, %v468
    %470 = vmatprep.mubr.f32.mxu0 %v123
    %471 = vmatmul.mubr.f32.gmra.mrb[0].mxu0 %v122
    %v472 = vpop.f32.mrb[0].mxu0
    %v473 = vadd.f32 %v279, %v472
    %v474 = vpop.f32.mrb[0].mxu0
    %v475 = vadd.f32 %v283, %v474
    %476 = vmatprep.mubr.f32.mxu0 %v125
    %477 = vmatmul.mubr.f32.gmra.mrb[0].mxu0 %v124
    %v478 = vpop.f32.mrb[0].mxu0
    %v479 = vadd.f32 %v279, %v478
    %v480 = vpop.f32.mrb[0].mxu0
    %v481 = vadd.f32 %v283, %v480
    %482 = vmatprep.mubr.f32.mxu0 %v127
    %483 = vmatmul.mubr.f32.gmra.mrb[0].mxu0 %v126
    %v484 = vpop.f32.mrb[0].mxu0
    %v485 = vadd.f32 %v279, %v484
    %v486 = vpop.f32.mrb[0].mxu0
    %v487 = vadd.f32 %v283, %v486
    %488 = vmatprep.mubr.f32.mxu0 %v129
    %489 = vmatmul.mubr.f32.gmra.mrb[0].mxu0 %v128
    %v490 = vpop.f32.mrb[0].mxu0
    %v491 = vadd.f32 %v279, %v490
    %v492 = vpop.f32.mrb[0].mxu0
    %v493 = vadd.f32 %v283, %v492
    %494 = vmatprep.mubr.f32.mxu0 %v131
    %495 = vmatmul.mubr.f32.gmra.mrb[0].mxu0 %v130
    %v496 = vpop.f32.mrb[0].mxu0
    %v497 = vadd.f32 %v279, %v496
    %v498 = vpop.f32.mrb[0].mxu0
    %v499 = vadd.f32 %v283, %v498
    %500 = vmatprep.mubr.f32.mxu0 %v133
    %501 = vmatmul.mubr.f32.gmra.mrb[0].mxu0 %v132
    %v502 = vpop.f32.mrb[0].mxu0
    %v503 = vadd.f32 %v279, %v502
    %v504 = vpop.f32.mrb[0].mxu0
    %v505 = vadd.f32 %v283, %v504
    %506 = vmatprep.mubr.f32.mxu0 %v135
    %507 = vmatmul.mubr.f32.gmra.mrb[0].mxu0 %v134
    %v508 = vpop.f32.mrb[0].mxu0
    %v509 = vadd.f32 %v279, %v508
    %v510 = vpop.f32.mrb[0].mxu0
    %v511 = vadd.f32 %v283, %v510
    %512 = vmatprep.mubr.f32.mxu0 %v137
    %513 = vmatmul.mubr.f32.gmra.mrb[0].mxu0 %v136
    %v514 = vpop.f32.mrb[0].mxu0
    %v515 = vadd.f32 %v279, %v514
    %v516 = vpop.f32.mrb[0].mxu0
    %v517 = vadd.f32 %v283, %v516
    %518 = vmatprep.mubr.f32.mxu0 %v139
    %519 = vmatmul.mubr.f32.gmra.mrb[0].mxu0 %v138
    %v520 = vpop.f32.mrb[0].mxu0
    %v521 = vadd.f32 %v279, %v520
    %v522 = vpop.f32.mrb[0].mxu0
    %v523 = vadd.f32 %v283, %v522
    %524 = vmatprep.mubr.f32.mxu0 %v141
    %525 = vmatmul.mubr.f32.gmra.mrb[0].mxu0 %v140
    %v526 = vpop.f32.mrb[0].mxu0
    %v527 = vadd.f32 %v279, %v526
    %v528 = vpop.f32.mrb[0].mxu0
    %v529 = vadd.f32 %v283, %v528
    %530 = vmatprep.mubr.f32.mxu0 %v143
    %531 = vmatmul.mubr.f32.gmra.mrb[0].mxu0 %v142
    %v532 = vpop.f32.mrb[0].mxu0
    %v533 = vadd.f32 %v279, %v532
    %v534 = vpop.f32.mrb[0].mxu0
    %v535 = vadd.f32 %v283, %v534
    %536 = vmatprep.mubr.f32.mxu0 %v145
    %537 = vmatmul.mubr.f32.gmra.mrb[0].mxu0 %v144
    %v538 = vpop.f32.mrb[0].mxu0
    %v539 = vadd.f32 %v279, %v538
    %v540 = vpop.f32.mrb[0].mxu0
    %v541 = vadd.f32 %v283, %v540
    %542 = vmatprep.mubr.f32.mxu0 %v147
    %543 = vmatmul.mubr.f32.gmra.mrb[0].mxu0 %v146
    %v544 = vpop.f32.mrb[0].mxu0
    %v545 = vadd.f32 %v279, %v544
    %v546 = vpop.f32.mrb[0].mxu0
    %v547 = vadd.f32 %v283, %v546
    %548 = vmatprep.mubr.f32.mxu0 %v149
    %549 = vmatmul.mubr.f32.gmra.mrb[0].mxu0 %v148
    %v550 = vpop.f32.mrb[0].mxu0
    %v551 = vadd.f32 %v279, %v550
    %v552 = vpop.f32.mrb[0].mxu0
    %v553 = vadd.f32 %v283, %v552
    %554 = vmatprep.mubr.f32.mxu0 %v151
    %555 = vmatmul.mubr.f32.gmra.mrb[0].mxu0 %v150
    %v556 = vpop.f32.mrb[0].mxu0
    %v557 = vadd.f32 %v279, %v556
    %v558 = vpop.f32.mrb[0].mxu0
    %v559 = vadd.f32 %v283, %v558
    %560 = vmatprep.mubr.f32.mxu0 %v153
    %561 = vmatmul.mubr.f32.gmra.mrb[0].mxu0 %v152
    %v562 = vpop.f32.mrb[0].mxu0
    %v563 = vadd.f32 %v279, %v562
    %v564 = vpop.f32.mrb[0].mxu0
    %v565 = vadd.f32 %v283, %v564
    %566 = vmatprep.mubr.f32.mxu0 %v155
    %567 = vmatmul.mubr.f32.gmra.mrb[0].mxu0 %v154
    %v568 = vpop.f32.mrb[0].mxu0
    %v569 = vadd.f32 %v279, %v568
    %v570 = vpop.f32.mrb[0].mxu0
    %v571 = vadd.f32 %v283, %v570
    %572 = vmatprep.mubr.f32.mxu0 %v157
    %573 = vmatmul.mubr.f32.gmra.mrb[0].mxu0 %v156
    %v574 = vpop.f32.mrb[0].mxu0
    %v575 = vadd.f32 %v279, %v574
    %v576 = vpop.f32.mrb[0].mxu0
    %v577 = vadd.f32 %v283, %v576
    %578 = vmatprep.mubr.f32.mxu0 %v159
    %579 = vmatmul.mubr.f32.gmra.mrb[0].mxu0 %v158
    %v580 = vpop.f32.mrb[0].mxu0
    %v581 = vadd.f32 %v279, %v580
    %v582 = vpop.f32.mrb[0].mxu0
    %v583 = vadd.f32 %v283, %v582
    %584 = vmatprep.mubr.f32.mxu0 %v161
    %585 = vmatmul.mubr.f32.gmra.mrb[0].mxu0 %v160
    %v586 = vpop.f32.mrb[0].mxu0
    %v587 = vadd.f32 %v279, %v586
    %v588 = vpop.f32.mrb[0].mxu0
    %v589 = vadd.f32 %v283, %v588
    %590 = vmatprep.mubr.f32.mxu0 %v163
    %591 = vmatmul.mubr.f32.gmra.mrb[0].mxu0 %v162
    %v592 = vpop.f32.mrb[0].mxu0
    %v593 = vadd.f32 %v279, %v592
    %v594 = vpop.f32.mrb[0].mxu0
    %v595 = vadd.f32 %v283, %v594
    %596 = vmatprep.mubr.f32.mxu0 %v165
    %597 = vmatmul.mubr.f32.gmra.mrb[0].mxu0 %v164
    %v598 = vpop.f32.mrb[0].mxu0
    %v599 = vadd.f32 %v279, %v598
    %v600 = vpop.f32.mrb[0].mxu0
    %v601 = vadd.f32 %v283, %v600
    %602 = vmatprep.mubr.f32.mxu0 %v167
    %603 = vmatmul.mubr.f32.gmra.mrb[0].mxu0 %v166
    %v604 = vpop.f32.mrb[0].mxu0
    %v605 = vadd.f32 %v279, %v604
    %v606 = vpop.f32.mrb[0].mxu0
    %v607 = vadd.f32 %v283, %v606
    %608 = vmatprep.mubr.f32.mxu0 %v169
    %609 = vmatmul.mubr.f32.gmra.mrb[0].mxu0 %v168
    %v610 = vpop.f32.mrb[0].mxu0
    %v611 = vadd.f32 %v279, %v610
    %v612 = vpop.f32.mrb[0].mxu0
    %v613 = vadd.f32 %v283, %v612
    %614 = vmatprep.mubr.f32.mxu0 %v171
    %615 = vmatmul.mubr.f32.gmra.mrb[0].mxu0 %v170
    %v616 = vpop.f32.mrb[0].mxu0
    %v617 = vadd.f32 %v279, %v616
    %v618 = vpop.f32.mrb[0].mxu0
    %v619 = vadd.f32 %v283, %v618
    %620 = vmatprep.mubr.f32.mxu0 %v173
    %621 = vmatmul.mubr.f32.gmra.mrb[0].mxu0 %v172
    %v622 = vpop.f32.mrb[0].mxu0
    %v623 = vadd.f32 %v279, %v622
    %v624 = vpop.f32.mrb[0].mxu0
    %v625 = vadd.f32 %v283, %v624
    %626 = vmatprep.mubr.f32.mxu0 %v175
    %627 = vmatmul.mubr.f32.gmra.mrb[0].mxu0 %v174
    %v628 = vpop.f32.mrb[0].mxu0
    %v629 = vadd.f32 %v279, %v628
    %v630 = vpop.f32.mrb[0].mxu0
    %v631 = vadd.f32 %v283, %v630
    %632 = vmatprep.mubr.f32.mxu0 %v177
    %633 = vmatmul.mubr.f32.gmra.mrb[0].mxu0 %v176
    %v634 = vpop.f32.mrb[0].mxu0
    %v635 = vadd.f32 %v279, %v634
    %v636 = vpop.f32.mrb[0].mxu0
    %v637 = vadd.f32 %v283, %v636
    %638 = vmatprep.mubr.f32.mxu0 %v179
    %639 = vmatmul.mubr.f32.gmra.mrb[0].mxu0 %v178
    %v640 = vpop.f32.mrb[0].mxu0
    %v641 = vadd.f32 %v279, %v640
    %v642 = vpop.f32.mrb[0].mxu0
    %v643 = vadd.f32 %v283, %v642
    %644 = vmatprep.mubr.f32.mxu0 %v181
    %645 = vmatmul.mubr.f32.gmra.mrb[0].mxu0 %v180
    %v646 = vpop.f32.mrb[0].mxu0
    %v647 = vadd.f32 %v279, %v646
    %v648 = vpop.f32.mrb[0].mxu0
    %v649 = vadd.f32 %v283, %v648
    %650 = vmatprep.mubr.f32.mxu0 %v183
    %651 = vmatmul.mubr.f32.gmra.mrb[0].mxu0 %v182
    %v652 = vpop.f32.mrb[0].mxu0
    %v653 = vadd.f32 %v279, %v652
    %v654 = vpop.f32.mrb[0].mxu0
    %v655 = vadd.f32 %v283, %v654
    %656 = vmatprep.mubr.f32.mxu0 %v185
    %657 = vmatmul.mubr.f32.gmra.mrb[0].mxu0 %v184
    %v658 = vpop.f32.mrb[0].mxu0
    %v659 = vadd.f32 %v279, %v658
    %v660 = vpop.f32.mrb[0].mxu0
    %v661 = vadd.f32 %v283, %v660
    %662 = vmatprep.mubr.f32.mxu0 %v187
    %663 = vmatmul.mubr.f32.gmra.mrb[0].mxu0 %v186
    %v664 = vpop.f32.mrb[0].mxu0
    %v665 = vadd.f32 %v279, %v664
    %v666 = vpop.f32.mrb[0].mxu0
    %v667 = vadd.f32 %v283, %v666
    %668 = vmatprep.mubr.f32.mxu0 %v189
    %669 = vmatmul.mubr.f32.gmra.mrb[0].mxu0 %v188
    %v670 = vpop.f32.mrb[0].mxu0
    %v671 = vadd.f32 %v279, %v670
    %v672 = vpop.f32.mrb[0].mxu0
    %v673 = vadd.f32 %v283, %v672
    %674 = vmatprep.mubr.f32.mxu0 %v191
    %675 = vmatmul.mubr.f32.gmra.mrb[0].mxu0 %v190
    %v676 = vpop.f32.mrb[0].mxu0
    %v677 = vadd.f32 %v279, %v676
    %v678 = vpop.f32.mrb[0].mxu0
    %v679 = vadd.f32 %v283, %v678
    %680 = vmatprep.mubr.f32.mxu0 %v193
    %681 = vmatmul.mubr.f32.gmra.mrb[0].mxu0 %v192
    %v682 = vpop.f32.mrb[0].mxu0
    %v683 = vadd.f32 %v279, %v682
    %v684 = vpop.f32.mrb[0].mxu0
    %v685 = vadd.f32 %v283, %v684
    %686 = vmatprep.mubr.f32.mxu0 %v195
    %687 = vmatmul.mubr.f32.gmra.mrb[0].mxu0 %v194
    %v688 = vpop.f32.mrb[0].mxu0
    %v689 = vadd.f32 %v279, %v688
    %v690 = vpop.f32.mrb[0].mxu0
    %v691 = vadd.f32 %v283, %v690
    %692 = vmatprep.mubr.f32.mxu0 %v197
    %693 = vmatmul.mubr.f32.gmra.mrb[0].mxu0 %v196
    %v694 = vpop.f32.mrb[0].mxu0
    %v695 = vadd.f32 %v279, %v694
    %v696 = vpop.f32.mrb[0].mxu0
    %v697 = vadd.f32 %v283, %v696
    %698 = vmatprep.mubr.f32.mxu0 %v199
    %699 = vmatmul.mubr.f32.gmra.mrb[0].mxu0 %v198
    %v700 = vpop.f32.mrb[0].mxu0
    %v701 = vadd.f32 %v279, %v700
    %v702 = vpop.f32.mrb[0].mxu0
    %v703 = vadd.f32 %v283, %v702
    %704 = vmatprep.mubr.f32.mxu0 %v201
    %705 = vmatmul.mubr.f32.gmra.mrb[0].mxu0 %v200
    %v706 = vpop.f32.mrb[0].mxu0
    %v707 = vadd.f32 %v279, %v706
    %v708 = vpop.f32.mrb[0].mxu0
    %v709 = vadd.f32 %v283, %v708
    %710 = vmatprep.mubr.f32.mxu0 %v203
    %711 = vmatmul.mubr.f32.gmra.mrb[0].mxu0 %v202
    %v712 = vpop.f32.mrb[0].mxu0
    %v713 = vadd.f32 %v279, %v712
    %v714 = vpop.f32.mrb[0].mxu0
    %v715 = vadd.f32 %v283, %v714
    %716 = vmatprep.mubr.f32.mxu0 %v205
    %717 = vmatmul.mubr.f32.gmra.mrb[0].mxu0 %v204
    %v718 = vpop.f32.mrb[0].mxu0
    %v719 = vadd.f32 %v279, %v718
    %v720 = vpop.f32.mrb[0].mxu0
    %v721 = vadd.f32 %v283, %v720
    %722 = vmatprep.mubr.f32.mxu0 %v207
    %723 = vmatmul.mubr.f32.gmra.mrb[0].mxu0 %v206
    %v724 = vpop.f32.mrb[0].mxu0
    %v725 = vadd.f32 %v279, %v724
    %v726 = vpop.f32.mrb[0].mxu0
    %v727 = vadd.f32 %v283, %v726
    %728 = vmatprep.mubr.f32.mxu0 %v209
    %729 = vmatmul.mubr.f32.gmra.mrb[0].mxu0 %v208
    %v730 = vpop.f32.mrb[0].mxu0
    %v731 = vadd.f32 %v279, %v730
    %v732 = vpop.f32.mrb[0].mxu0
    %v733 = vadd.f32 %v283, %v732
    %734 = vdwg.mxu0
    %v735 = vmax.f32 %v353, 0.0
    %v736 = vmax.f32 %v355, 0.0
    %v737 = vmax.f32 %v359, 0.0
    %v738 = vmax.f32 %v361, 0.0
    %v739 = vmax.f32 %v365, 0.0
    %v740 = vmax.f32 %v367, 0.0
    %v741 = vmax.f32 %v371, 0.0
    %v742 = vmax.f32 %v373, 0.0
    %v743 = vmax.f32 %v377, 0.0
    %v744 = vmax.f32 %v379, 0.0
    %v745 = vmax.f32 %v383, 0.0
    %v746 = vmax.f32 %v385, 0.0
    %v747 = vmax.f32 %v389, 0.0
    %v748 = vmax.f32 %v391, 0.0
    %v749 = vmax.f32 %v395, 0.0
    %v750 = vmax.f32 %v397, 0.0
    %v751 = vmax.f32 %v401, 0.0
    %v752 = vmax.f32 %v403, 0.0
    %v753 = vmax.f32 %v407, 0.0
    %v754 = vmax.f32 %v409, 0.0
    %v755 = vmax.f32 %v413, 0.0
    %v756 = vmax.f32 %v415, 0.0
    %v757 = vmax.f32 %v419, 0.0
    %v758 = vmax.f32 %v421, 0.0
    %v759 = vmax.f32 %v425, 0.0
    %v760 = vmax.f32 %v427, 0.0
    %v761 = vmax.f32 %v431, 0.0
    %v762 = vmax.f32 %v433, 0.0
    %v763 = vmax.f32 %v437, 0.0
    %v764 = vmax.f32 %v439, 0.0
    %v765 = vmax.f32 %v443, 0.0
    %v766 = vmax.f32 %v445, 0.0
    %v767 = vmax.f32 %v449, 0.0
    %v768 = vmax.f32 %v451, 0.0
    %v769 = vmax.f32 %v455, 0.0
    %v770 = vmax.f32 %v457, 0.0
    %v771 = vmax.f32 %v461, 0.0
    %v772 = vmax.f32 %v463, 0.0
    %v773 = vmax.f32 %v467, 0.0
    %v774 = vmax.f32 %v469, 0.0
    %v775 = vmax.f32 %v473, 0.0
    %v776 = vmax.f32 %v475, 0.0
    %v777 = vmax.f32 %v479, 0.0
    %v778 = vmax.f32 %v481, 0.0
    %v779 = vmax.f32 %v485, 0.0
    %v780 = vmax.f32 %v487, 0.0
    %v781 = vmax.f32 %v491, 0.0
    %v782 = vmax.f32 %v493, 0.0
    %v783 = vmax.f32 %v497, 0.0
    %v784 = vmax.f32 %v499, 0.0
    %v785 = vmax.f32 %v503, 0.0
    %v786 = vmax.f32 %v505, 0.0
    %v787 = vmax.f32 %v509, 0.0
    %v788 = vmax.f32 %v511, 0.0
    %v789 = vmax.f32 %v515, 0.0
    %v790 = vmax.f32 %v517, 0.0
    %v791 = vmax.f32 %v521, 0.0
    %v792 = vmax.f32 %v523, 0.0
    %v793 = vmax.f32 %v527, 0.0
    %v794 = vmax.f32 %v529, 0.0
    %v795 = vmax.f32 %v533, 0.0
    %v796 = vmax.f32 %v535, 0.0
    %v797 = vmax.f32 %v539, 0.0
    %v798 = vmax.f32 %v541, 0.0
    %v799 = vmax.f32 %v545, 0.0
    %v800 = vmax.f32 %v547, 0.0
    %v801 = vmax.f32 %v551, 0.0
    %v802 = vmax.f32 %v553, 0.0
    %v803 = vmax.f32 %v557, 0.0
    %v804 = vmax.f32 %v559, 0.0
    %v805 = vmax.f32 %v563, 0.0
    %v806 = vmax.f32 %v565, 0.0
    %v807 = vmax.f32 %v569, 0.0
    %v808 = vmax.f32 %v571, 0.0
    %v809 = vmax.f32 %v575, 0.0
    %v810 = vmax.f32 %v577, 0.0
    %v811 = vmax.f32 %v581, 0.0
    %v812 = vmax.f32 %v583, 0.0
    %v813 = vmax.f32 %v587, 0.0
    %v814 = vmax.f32 %v589, 0.0
    %v815 = vmax.f32 %v593, 0.0
    %v816 = vmax.f32 %v595, 0.0
    %v817 = vmax.f32 %v599, 0.0
    %v818 = vmax.f32 %v601, 0.0
    %v819 = vmax.f32 %v605, 0.0
    %v820 = vmax.f32 %v607, 0.0
    %v821 = vmax.f32 %v611, 0.0
    %v822 = vmax.f32 %v613, 0.0
    %v823 = vmax.f32 %v617, 0.0
    %v824 = vmax.f32 %v619, 0.0
    %v825 = vmax.f32 %v623, 0.0
    %v826 = vmax.f32 %v625, 0.0
    %v827 = vmax.f32 %v629, 0.0
    %v828 = vmax.f32 %v631, 0.0
    %v829 = vmax.f32 %v635, 0.0
    %v830 = vmax.f32 %v637, 0.0
    %v831 = vmax.f32 %v641, 0.0
    %v832 = vmax.f32 %v643, 0.0
    %v833 = vmax.f32 %v647, 0.0
    %v834 = vmax.f32 %v649, 0.0
    %v835 = vmax.f32 %v653, 0.0
    %v836 = vmax.f32 %v655, 0.0
    %v837 = vmax.f32 %v659, 0.0
    %v838 = vmax.f32 %v661, 0.0
    %v839 = vmax.f32 %v665, 0.0
    %v840 = vmax.f32 %v667, 0.0
    %v841 = vmax.f32 %v671, 0.0
    %v842 = vmax.f32 %v673, 0.0
    %v843 = vmax.f32 %v677, 0.0
    %v844 = vmax.f32 %v679, 0.0
    %v845 = vmax.f32 %v683, 0.0
    %v846 = vmax.f32 %v685, 0.0
    %v847 = vmax.f32 %v689, 0.0
    %v848 = vmax.f32 %v691, 0.0
    %v849 = vmax.f32 %v695, 0.0
    %v850 = vmax.f32 %v697, 0.0
    %v851 = vmax.f32 %v701, 0.0
    %v852 = vmax.f32 %v703, 0.0
    %v853 = vmax.f32 %v707, 0.0
    %v854 = vmax.f32 %v709, 0.0
    %v855 = vmax.f32 %v713, 0.0
    %v856 = vmax.f32 %v715, 0.0
    %v857 = vmax.f32 %v719, 0.0
    %v858 = vmax.f32 %v721, 0.0
    %v859 = vmax.f32 %v725, 0.0
    %v860 = vmax.f32 %v727, 0.0
    %v861 = vmax.f32 %v731, 0.0
    %v862 = vmax.f32 %v733, 0.0
    %v863 = vld [vmem:[#allocation7] sm:$0xff]
    %v864 = vld [vmem:[#allocation7 + $0x8] sm:$0xff]
    %v865 = vld [vmem:[#allocation7 + $0x10] sm:$0xff]
    %v866 = vld [vmem:[#allocation7 + $0x18] sm:$0xff]
    %v867 = vld [vmem:[#allocation7 + $0x20] sm:$0xff]
    %v868 = vld [vmem:[#allocation7 + $0x28] sm:$0xff]
    %v869 = vld [vmem:[#allocation7 + $0x30] sm:$0xff]
    %v870 = vld [vmem:[#allocation7 + $0x38] sm:$0xff]
    %v871 = vld [vmem:[#allocation7 + $0x40] sm:$0xff]
    %v872 = vld [vmem:[#allocation7 + $0x48] sm:$0xff]
    %v873 = vld [vmem:[#allocation7 + $0x50] sm:$0xff]
    %v874 = vld [vmem:[#allocation7 + $0x58] sm:$0xff]
    %v875 = vld [vmem:[#allocation7 + $0x60] sm:$0xff]
    %v876 = vld [vmem:[#allocation7 + $0x68] sm:$0xff]
    %v877 = vld [vmem:[#allocation7 + $0x70] sm:$0xff]
    %v878 = vld [vmem:[#allocation7 + $0x78] sm:$0xff]
    %v879 = vld [vmem:[#allocation7 + $0x80] sm:$0xff]
    %v880 = vld [vmem:[#allocation7 + $0x88] sm:$0xff]
    %v881 = vld [vmem:[#allocation7 + $0x90] sm:$0xff]
    %v882 = vld [vmem:[#allocation7 + $0x98] sm:$0xff]
    %v883 = vld [vmem:[#allocation7 + $0xa0] sm:$0xff]
    %v884 = vld [vmem:[#allocation7 + $0xa8] sm:$0xff]
    %v885 = vld [vmem:[#allocation7 + $0xb0] sm:$0xff]
    %v886 = vld [vmem:[#allocation7 + $0xb8] sm:$0xff]
    %v887 = vld [vmem:[#allocation7 + $0xc0] sm:$0xff]
    %v888 = vld [vmem:[#allocation7 + $0xc8] sm:$0xff]
    %v889 = vld [vmem:[#allocation7 + $0xd0] sm:$0xff]
    %v890 = vld [vmem:[#allocation7 + $0xd8] sm:$0xff]
    %v891 = vld [vmem:[#allocation7 + $0xe0] sm:$0xff]
    %v892 = vld [vmem:[#allocation7 + $0xe8] sm:$0xff]
    %v893 = vld [vmem:[#allocation7 + $0xf0] sm:$0xff]
    %v894 = vld [vmem:[#allocation7 + $0xf8] sm:$0xff]
    %v895 = vld [vmem:[#allocation7 + $0x100] sm:$0xff]
    %v896 = vld [vmem:[#allocation7 + $0x108] sm:$0xff]
    %v897 = vld [vmem:[#allocation7 + $0x110] sm:$0xff]
    %v898 = vld [vmem:[#allocation7 + $0x118] sm:$0xff]
    %v899 = vld [vmem:[#allocation7 + $0x120] sm:$0xff]
    %v900 = vld [vmem:[#allocation7 + $0x128] sm:$0xff]
    %v901 = vld [vmem:[#allocation7 + $0x130] sm:$0xff]
    %v902 = vld [vmem:[#allocation7 + $0x138] sm:$0xff]
    %v903 = vld [vmem:[#allocation7 + $0x140] sm:$0xff]
    %v904 = vld [vmem:[#allocation7 + $0x148] sm:$0xff]
    %v905 = vld [vmem:[#allocation7 + $0x150] sm:$0xff]
    %v906 = vld [vmem:[#allocation7 + $0x158] sm:$0xff]
    %v907 = vld [vmem:[#allocation7 + $0x160] sm:$0xff]
    %v908 = vld [vmem:[#allocation7 + $0x168] sm:$0xff]
    %v909 = vld [vmem:[#allocation7 + $0x170] sm:$0xff]
    %v910 = vld [vmem:[#allocation7 + $0x178] sm:$0xff]
    %v911 = vld [vmem:[#allocation7 + $0x180] sm:$0xff]
    %v912 = vld [vmem:[#allocation7 + $0x188] sm:$0xff]
    %v913 = vld [vmem:[#allocation7 + $0x190] sm:$0xff]
    %v914 = vld [vmem:[#allocation7 + $0x198] sm:$0xff]
    %v915 = vld [vmem:[#allocation7 + $0x1a0] sm:$0xff]
    %v916 = vld [vmem:[#allocation7 + $0x1a8] sm:$0xff]
    %v917 = vld [vmem:[#allocation7 + $0x1b0] sm:$0xff]
    %v918 = vld [vmem:[#allocation7 + $0x1b8] sm:$0xff]
    %v919 = vld [vmem:[#allocation7 + $0x1c0] sm:$0xff]
    %v920 = vld [vmem:[#allocation7 + $0x1c8] sm:$0xff]
    %v921 = vld [vmem:[#allocation7 + $0x1d0] sm:$0xff]
    %v922 = vld [vmem:[#allocation7 + $0x1d8] sm:$0xff]
    %v923 = vld [vmem:[#allocation7 + $0x1e0] sm:$0xff]
    %v924 = vld [vmem:[#allocation7 + $0x1e8] sm:$0xff]
    %v925 = vld [vmem:[#allocation7 + $0x1f0] sm:$0xff]
    %v926 = vld [vmem:[#allocation7 + $0x1f8] sm:$0xff]
    %v927 = vld [vmem:[%s4] sm:$0x3]
    %v929 = vlaneseq
    %v930 = vshrl.u32 %v929, 7
    %v931 = vsub.s32 0, %v930
    %v932 = vrot.slane %v927, %v931
    %v933 = vlaneseq
    %v934 = vshrl.u32 %v933, 7
    %v935 = vsub.s32 1, %v934
    %v936 = vrot.slane %v927, %v935
    %939 = vmatprep.subr.mxu0 %v864
    %940 = vmatpush1.msra.mxu0 %v863
    %941 = vmatprep.subr.mxu0 %v866
    %942 = vmatpush1.msra.mxu0 %v865
    %943 = vmatprep.subr.mxu0 %v868
    %944 = vmatpush1.msra.mxu0 %v867
    %945 = vmatprep.subr.mxu0 %v870
    %946 = vmatpush1.msra.mxu0 %v869
    %947 = vmatprep.subr.mxu0 %v872
    %948 = vmatpush1.msra.mxu0 %v871
    %949 = vmatprep.subr.mxu0 %v874
    %950 = vmatpush1.msra.mxu0 %v873
    %951 = vmatprep.subr.mxu0 %v876
    %952 = vmatpush1.msra.mxu0 %v875
    %953 = vmatprep.subr.mxu0 %v878
    %954 = vmatpush1.msra.mxu0 %v877
    %955 = vmatprep.subr.mxu0 %v880
    %956 = vmatpush1.msra.mxu0 %v879
    %957 = vmatprep.subr.mxu0 %v882
    %958 = vmatpush1.msra.mxu0 %v881
    %959 = vmatprep.subr.mxu0 %v884
    %960 = vmatpush1.msra.mxu0 %v883
    %961 = vmatprep.subr.mxu0 %v886
    %962 = vmatpush1.msra.mxu0 %v885
    %963 = vmatprep.subr.mxu0 %v888
    %964 = vmatpush1.msra.mxu0 %v887
    %965 = vmatprep.subr.mxu0 %v890
    %966 = vmatpush1.msra.mxu0 %v889
    %967 = vmatprep.subr.mxu0 %v892
    %968 = vmatpush1.msra.mxu0 %v891
    %969 = vmatprep.subr.mxu0 %v894
    %970 = vmatpush1.msra.mxu0 %v893
    %971 = vmatprep.subr.mxu0 %v896
    %972 = vmatpush1.msra.mxu0 %v895
    %973 = vmatprep.subr.mxu0 %v898
    %974 = vmatpush1.msra.mxu0 %v897
    %975 = vmatprep.subr.mxu0 %v900
    %976 = vmatpush1.msra.mxu0 %v899
    %977 = vmatprep.subr.mxu0 %v902
    %978 = vmatpush1.msra.mxu0 %v901
    %979 = vmatprep.subr.mxu0 %v904
    %980 = vmatpush1.msra.mxu0 %v903
    %981 = vmatprep.subr.mxu0 %v906
    %982 = vmatpush1.msra.mxu0 %v905
    %983 = vmatprep.subr.mxu0 %v908
    %984 = vmatpush1.msra.mxu0 %v907
    %985 = vmatprep.subr.mxu0 %v910
    %986 = vmatpush1.msra.mxu0 %v909
    %987 = vmatprep.subr.mxu0 %v912
    %988 = vmatpush1.msra.mxu0 %v911
    %989 = vmatprep.subr.mxu0 %v914
    %990 = vmatpush1.msra.mxu0 %v913
    %991 = vmatprep.subr.mxu0 %v916
    %992 = vmatpush1.msra.mxu0 %v915
    %993 = vmatprep.subr.mxu0 %v918
    %994 = vmatpush1.msra.mxu0 %v917
    %995 = vmatprep.subr.mxu0 %v920
    %996 = vmatpush1.msra.mxu0 %v919
    %997 = vmatprep.subr.mxu0 %v922
    %998 = vmatpush1.msra.mxu0 %v921
    %999 = vmatprep.subr.mxu0 %v924
    %1000 = vmatpush1.msra.mxu0 %v923
    %1001 = vmatprep.subr.mxu0 %v926
    %1002 = vmatpush1.msra.mxu0 %v925
    %1003 = vmatprep.mubr.f32.mxu0 %v736
    %1004 = vmatmul.mubr.f32.gmra.mrb[0].mxu0 %v735
    %v1005 = vpop.f32.mrb[0].mxu0
    %v1006 = vadd.f32 %v932, %v1005
    %v1007 = vpop.f32.mrb[0].mxu0
    %v1008 = vadd.f32 %v936, %v1007
    %1009 = vmatprep.mubr.f32.mxu0 %v738
    %1010 = vmatmul.mubr.f32.gmra.mrb[0].mxu0 %v737
    %v1011 = vpop.f32.mrb[0].mxu0
    %v1012 = vadd.f32 %v932, %v1011
    %v1013 = vpop.f32.mrb[0].mxu0
    %v1014 = vadd.f32 %v936, %v1013
    %1015 = vmatprep.mubr.f32.mxu0 %v740
    %1016 = vmatmul.mubr.f32.gmra.mrb[0].mxu0 %v739
    %v1017 = vpop.f32.mrb[0].mxu0
    %v1018 = vadd.f32 %v932, %v1017
    %v1019 = vpop.f32.mrb[0].mxu0
    %v1020 = vadd.f32 %v936, %v1019
    %1021 = vmatprep.mubr.f32.mxu0 %v742
    %1022 = vmatmul.mubr.f32.gmra.mrb[0].mxu0 %v741
    %v1023 = vpop.f32.mrb[0].mxu0
    %v1024 = vadd.f32 %v932, %v1023
    %v1025 = vpop.f32.mrb[0].mxu0
    %v1026 = vadd.f32 %v936, %v1025
    %1027 = vmatprep.mubr.f32.mxu0 %v744
    %1028 = vmatmul.mubr.f32.gmra.mrb[0].mxu0 %v743
    %v1029 = vpop.f32.mrb[0].mxu0
    %v1030 = vadd.f32 %v932, %v1029
    %v1031 = vpop.f32.mrb[0].mxu0
    %v1032 = vadd.f32 %v936, %v1031
    %1033 = vmatprep.mubr.f32.mxu0 %v746
    %1034 = vmatmul.mubr.f32.gmra.mrb[0].mxu0 %v745
    %v1035 = vpop.f32.mrb[0].mxu0
    %v1036 = vadd.f32 %v932, %v1035
    %v1037 = vpop.f32.mrb[0].mxu0
    %v1038 = vadd.f32 %v936, %v1037
    %1039 = vmatprep.mubr.f32.mxu0 %v748
    %1040 = vmatmul.mubr.f32.gmra.mrb[0].mxu0 %v747
    %v1041 = vpop.f32.mrb[0].mxu0
    %v1042 = vadd.f32 %v932, %v1041
    %v1043 = vpop.f32.mrb[0].mxu0
    %v1044 = vadd.f32 %v936, %v1043
    %1045 = vmatprep.mubr.f32.mxu0 %v750
    %1046 = vmatmul.mubr.f32.gmra.mrb[0].mxu0 %v749
    %v1047 = vpop.f32.mrb[0].mxu0
    %v1048 = vadd.f32 %v932, %v1047
    %v1049 = vpop.f32.mrb[0].mxu0
    %v1050 = vadd.f32 %v936, %v1049
    %1051 = vmatprep.mubr.f32.mxu0 %v752
    %1052 = vmatmul.mubr.f32.gmra.mrb[0].mxu0 %v751
    %v1053 = vpop.f32.mrb[0].mxu0
    %v1054 = vadd.f32 %v932, %v1053
    %v1055 = vpop.f32.mrb[0].mxu0
    %v1056 = vadd.f32 %v936, %v1055
    %1057 = vmatprep.mubr.f32.mxu0 %v754
    %1058 = vmatmul.mubr.f32.gmra.mrb[0].mxu0 %v753
    %v1059 = vpop.f32.mrb[0].mxu0
    %v1060 = vadd.f32 %v932, %v1059
    %v1061 = vpop.f32.mrb[0].mxu0
    %v1062 = vadd.f32 %v936, %v1061
    %1063 = vmatprep.mubr.f32.mxu0 %v756
    %1064 = vmatmul.mubr.f32.gmra.mrb[0].mxu0 %v755
    %v1065 = vpop.f32.mrb[0].mxu0
    %v1066 = vadd.f32 %v932, %v1065
    %v1067 = vpop.f32.mrb[0].mxu0
    %v1068 = vadd.f32 %v936, %v1067
    %1069 = vmatprep.mubr.f32.mxu0 %v758
    %1070 = vmatmul.mubr.f32.gmra.mrb[0].mxu0 %v757
    %v1071 = vpop.f32.mrb[0].mxu0
    %v1072 = vadd.f32 %v932, %v1071
    %v1073 = vpop.f32.mrb[0].mxu0
    %v1074 = vadd.f32 %v936, %v1073
    %1075 = vmatprep.mubr.f32.mxu0 %v760
    %1076 = vmatmul.mubr.f32.gmra.mrb[0].mxu0 %v759
    %v1077 = vpop.f32.mrb[0].mxu0
    %v1078 = vadd.f32 %v932, %v1077
    %v1079 = vpop.f32.mrb[0].mxu0
    %v1080 = vadd.f32 %v936, %v1079
    %1081 = vmatprep.mubr.f32.mxu0 %v762
    %1082 = vmatmul.mubr.f32.gmra.mrb[0].mxu0 %v761
    %v1083 = vpop.f32.mrb[0].mxu0
    %v1084 = vadd.f32 %v932, %v1083
    %v1085 = vpop.f32.mrb[0].mxu0
    %v1086 = vadd.f32 %v936, %v1085
    %1087 = vmatprep.mubr.f32.mxu0 %v764
    %1088 = vmatmul.mubr.f32.gmra.mrb[0].mxu0 %v763
    %v1089 = vpop.f32.mrb[0].mxu0
    %v1090 = vadd.f32 %v932, %v1089
    %v1091 = vpop.f32.mrb[0].mxu0
    %v1092 = vadd.f32 %v936, %v1091
    %1093 = vmatprep.mubr.f32.mxu0 %v766
    %1094 = vmatmul.mubr.f32.gmra.mrb[0].mxu0 %v765
    %v1095 = vpop.f32.mrb[0].mxu0
    %v1096 = vadd.f32 %v932, %v1095
    %v1097 = vpop.f32.mrb[0].mxu0
    %v1098 = vadd.f32 %v936, %v1097
    %1099 = vmatprep.mubr.f32.mxu0 %v768
    %1100 = vmatmul.mubr.f32.gmra.mrb[0].mxu0 %v767
    %v1101 = vpop.f32.mrb[0].mxu0
    %v1102 = vadd.f32 %v932, %v1101
    %v1103 = vpop.f32.mrb[0].mxu0
    %v1104 = vadd.f32 %v936, %v1103
    %1105 = vmatprep.mubr.f32.mxu0 %v770
    %1106 = vmatmul.mubr.f32.gmra.mrb[0].mxu0 %v769
    %v1107 = vpop.f32.mrb[0].mxu0
    %v1108 = vadd.f32 %v932, %v1107
    %v1109 = vpop.f32.mrb[0].mxu0
    %v1110 = vadd.f32 %v936, %v1109
    %1111 = vmatprep.mubr.f32.mxu0 %v772
    %1112 = vmatmul.mubr.f32.gmra.mrb[0].mxu0 %v771
    %v1113 = vpop.f32.mrb[0].mxu0
    %v1114 = vadd.f32 %v932, %v1113
    %v1115 = vpop.f32.mrb[0].mxu0
    %v1116 = vadd.f32 %v936, %v1115
    %1117 = vmatprep.mubr.f32.mxu0 %v774
    %1118 = vmatmul.mubr.f32.gmra.mrb[0].mxu0 %v773
    %v1119 = vpop.f32.mrb[0].mxu0
    %v1120 = vadd.f32 %v932, %v1119
    %v1121 = vpop.f32.mrb[0].mxu0
    %v1122 = vadd.f32 %v936, %v1121
    %1123 = vmatprep.mubr.f32.mxu0 %v776
    %1124 = vmatmul.mubr.f32.gmra.mrb[0].mxu0 %v775
    %v1125 = vpop.f32.mrb[0].mxu0
    %v1126 = vadd.f32 %v932, %v1125
    %v1127 = vpop.f32.mrb[0].mxu0
    %v1128 = vadd.f32 %v936, %v1127
    %1129 = vmatprep.mubr.f32.mxu0 %v778
    %1130 = vmatmul.mubr.f32.gmra.mrb[0].mxu0 %v777
    %v1131 = vpop.f32.mrb[0].mxu0
    %v1132 = vadd.f32 %v932, %v1131
    %v1133 = vpop.f32.mrb[0].mxu0
    %v1134 = vadd.f32 %v936, %v1133
    %1135 = vmatprep.mubr.f32.mxu0 %v780
    %1136 = vmatmul.mubr.f32.gmra.mrb[0].mxu0 %v779
    %v1137 = vpop.f32.mrb[0].mxu0
    %v1138 = vadd.f32 %v932, %v1137
    %v1139 = vpop.f32.mrb[0].mxu0
    %v1140 = vadd.f32 %v936, %v1139
    %1141 = vmatprep.mubr.f32.mxu0 %v782
    %1142 = vmatmul.mubr.f32.gmra.mrb[0].mxu0 %v781
    %v1143 = vpop.f32.mrb[0].mxu0
    %v1144 = vadd.f32 %v932, %v1143
    %v1145 = vpop.f32.mrb[0].mxu0
    %v1146 = vadd.f32 %v936, %v1145
    %1147 = vmatprep.mubr.f32.mxu0 %v784
    %1148 = vmatmul.mubr.f32.gmra.mrb[0].mxu0 %v783
    %v1149 = vpop.f32.mrb[0].mxu0
    %v1150 = vadd.f32 %v932, %v1149
    %v1151 = vpop.f32.mrb[0].mxu0
    %v1152 = vadd.f32 %v936, %v1151
    %1153 = vmatprep.mubr.f32.mxu0 %v786
    %1154 = vmatmul.mubr.f32.gmra.mrb[0].mxu0 %v785
    %v1155 = vpop.f32.mrb[0].mxu0
    %v1156 = vadd.f32 %v932, %v1155
    %v1157 = vpop.f32.mrb[0].mxu0
    %v1158 = vadd.f32 %v936, %v1157
    %1159 = vmatprep.mubr.f32.mxu0 %v788
    %1160 = vmatmul.mubr.f32.gmra.mrb[0].mxu0 %v787
    %v1161 = vpop.f32.mrb[0].mxu0
    %v1162 = vadd.f32 %v932, %v1161
    %v1163 = vpop.f32.mrb[0].mxu0
    %v1164 = vadd.f32 %v936, %v1163
    %1165 = vmatprep.mubr.f32.mxu0 %v790
    %1166 = vmatmul.mubr.f32.gmra.mrb[0].mxu0 %v789
    %v1167 = vpop.f32.mrb[0].mxu0
    %v1168 = vadd.f32 %v932, %v1167
    %v1169 = vpop.f32.mrb[0].mxu0
    %v1170 = vadd.f32 %v936, %v1169
    %1171 = vmatprep.mubr.f32.mxu0 %v792
    %1172 = vmatmul.mubr.f32.gmra.mrb[0].mxu0 %v791
    %v1173 = vpop.f32.mrb[0].mxu0
    %v1174 = vadd.f32 %v932, %v1173
    %v1175 = vpop.f32.mrb[0].mxu0
    %v1176 = vadd.f32 %v936, %v1175
    %1177 = vmatprep.mubr.f32.mxu0 %v794
    %1178 = vmatmul.mubr.f32.gmra.mrb[0].mxu0 %v793
    %v1179 = vpop.f32.mrb[0].mxu0
    %v1180 = vadd.f32 %v932, %v1179
    %v1181 = vpop.f32.mrb[0].mxu0
    %v1182 = vadd.f32 %v936, %v1181
    %1183 = vmatprep.mubr.f32.mxu0 %v796
    %1184 = vmatmul.mubr.f32.gmra.mrb[0].mxu0 %v795
    %v1185 = vpop.f32.mrb[0].mxu0
    %v1186 = vadd.f32 %v932, %v1185
    %v1187 = vpop.f32.mrb[0].mxu0
    %v1188 = vadd.f32 %v936, %v1187
    %1189 = vmatprep.mubr.f32.mxu0 %v798
    %1190 = vmatmul.mubr.f32.gmra.mrb[0].mxu0 %v797
    %v1191 = vpop.f32.mrb[0].mxu0
    %v1192 = vadd.f32 %v932, %v1191
    %v1193 = vpop.f32.mrb[0].mxu0
    %v1194 = vadd.f32 %v936, %v1193
    %1195 = vmatprep.mubr.f32.mxu0 %v800
    %1196 = vmatmul.mubr.f32.gmra.mrb[0].mxu0 %v799
    %v1197 = vpop.f32.mrb[0].mxu0
    %v1198 = vadd.f32 %v932, %v1197
    %v1199 = vpop.f32.mrb[0].mxu0
    %v1200 = vadd.f32 %v936, %v1199
    %1201 = vmatprep.mubr.f32.mxu0 %v802
    %1202 = vmatmul.mubr.f32.gmra.mrb[0].mxu0 %v801
    %v1203 = vpop.f32.mrb[0].mxu0
    %v1204 = vadd.f32 %v932, %v1203
    %v1205 = vpop.f32.mrb[0].mxu0
    %v1206 = vadd.f32 %v936, %v1205
    %1207 = vmatprep.mubr.f32.mxu0 %v804
    %1208 = vmatmul.mubr.f32.gmra.mrb[0].mxu0 %v803
    %v1209 = vpop.f32.mrb[0].mxu0
    %v1210 = vadd.f32 %v932, %v1209
    %v1211 = vpop.f32.mrb[0].mxu0
    %v1212 = vadd.f32 %v936, %v1211
    %1213 = vmatprep.mubr.f32.mxu0 %v806
    %1214 = vmatmul.mubr.f32.gmra.mrb[0].mxu0 %v805
    %v1215 = vpop.f32.mrb[0].mxu0
    %v1216 = vadd.f32 %v932, %v1215
    %v1217 = vpop.f32.mrb[0].mxu0
    %v1218 = vadd.f32 %v936, %v1217
    %1219 = vmatprep.mubr.f32.mxu0 %v808
    %1220 = vmatmul.mubr.f32.gmra.mrb[0].mxu0 %v807
    %v1221 = vpop.f32.mrb[0].mxu0
    %v1222 = vadd.f32 %v932, %v1221
    %v1223 = vpop.f32.mrb[0].mxu0
    %v1224 = vadd.f32 %v936, %v1223
    %1225 = vmatprep.mubr.f32.mxu0 %v810
    %1226 = vmatmul.mubr.f32.gmra.mrb[0].mxu0 %v809
    %v1227 = vpop.f32.mrb[0].mxu0
    %v1228 = vadd.f32 %v932, %v1227
    %v1229 = vpop.f32.mrb[0].mxu0
    %v1230 = vadd.f32 %v936, %v1229
    %1231 = vmatprep.mubr.f32.mxu0 %v812
    %1232 = vmatmul.mubr.f32.gmra.mrb[0].mxu0 %v811
    %v1233 = vpop.f32.mrb[0].mxu0
    %v1234 = vadd.f32 %v932, %v1233
    %v1235 = vpop.f32.mrb[0].mxu0
    %v1236 = vadd.f32 %v936, %v1235
    %1237 = vmatprep.mubr.f32.mxu0 %v814
    %1238 = vmatmul.mubr.f32.gmra.mrb[0].mxu0 %v813
    %v1239 = vpop.f32.mrb[0].mxu0
    %v1240 = vadd.f32 %v932, %v1239
    %v1241 = vpop.f32.mrb[0].mxu0
    %v1242 = vadd.f32 %v936, %v1241
    %1243 = vmatprep.mubr.f32.mxu0 %v816
    %1244 = vmatmul.mubr.f32.gmra.mrb[0].mxu0 %v815
    %v1245 = vpop.f32.mrb[0].mxu0
    %v1246 = vadd.f32 %v932, %v1245
    %v1247 = vpop.f32.mrb[0].mxu0
    %v1248 = vadd.f32 %v936, %v1247
    %1249 = vmatprep.mubr.f32.mxu0 %v818
    %1250 = vmatmul.mubr.f32.gmra.mrb[0].mxu0 %v817
    %v1251 = vpop.f32.mrb[0].mxu0
    %v1252 = vadd.f32 %v932, %v1251
    %v1253 = vpop.f32.mrb[0].mxu0
    %v1254 = vadd.f32 %v936, %v1253
    %1255 = vmatprep.mubr.f32.mxu0 %v820
    %1256 = vmatmul.mubr.f32.gmra.mrb[0].mxu0 %v819
    %v1257 = vpop.f32.mrb[0].mxu0
    %v1258 = vadd.f32 %v932, %v1257
    %v1259 = vpop.f32.mrb[0].mxu0
    %v1260 = vadd.f32 %v936, %v1259
    %1261 = vmatprep.mubr.f32.mxu0 %v822
    %1262 = vmatmul.mubr.f32.gmra.mrb[0].mxu0 %v821
    %v1263 = vpop.f32.mrb[0].mxu0
    %v1264 = vadd.f32 %v932, %v1263
    %v1265 = vpop.f32.mrb[0].mxu0
    %v1266 = vadd.f32 %v936, %v1265
    %1267 = vmatprep.mubr.f32.mxu0 %v824
    %1268 = vmatmul.mubr.f32.gmra.mrb[0].mxu0 %v823
    %v1269 = vpop.f32.mrb[0].mxu0
    %v1270 = vadd.f32 %v932, %v1269
    %v1271 = vpop.f32.mrb[0].mxu0
    %v1272 = vadd.f32 %v936, %v1271
    %1273 = vmatprep.mubr.f32.mxu0 %v826
    %1274 = vmatmul.mubr.f32.gmra.mrb[0].mxu0 %v825
    %v1275 = vpop.f32.mrb[0].mxu0
    %v1276 = vadd.f32 %v932, %v1275
    %v1277 = vpop.f32.mrb[0].mxu0
    %v1278 = vadd.f32 %v936, %v1277
    %1279 = vmatprep.mubr.f32.mxu0 %v828
    %1280 = vmatmul.mubr.f32.gmra.mrb[0].mxu0 %v827
    %v1281 = vpop.f32.mrb[0].mxu0
    %v1282 = vadd.f32 %v932, %v1281
    %v1283 = vpop.f32.mrb[0].mxu0
    %v1284 = vadd.f32 %v936, %v1283
    %1285 = vmatprep.mubr.f32.mxu0 %v830
    %1286 = vmatmul.mubr.f32.gmra.mrb[0].mxu0 %v829
    %v1287 = vpop.f32.mrb[0].mxu0
    %v1288 = vadd.f32 %v932, %v1287
    %v1289 = vpop.f32.mrb[0].mxu0
    %v1290 = vadd.f32 %v936, %v1289
    %1291 = vmatprep.mubr.f32.mxu0 %v832
    %1292 = vmatmul.mubr.f32.gmra.mrb[0].mxu0 %v831
    %v1293 = vpop.f32.mrb[0].mxu0
    %v1294 = vadd.f32 %v932, %v1293
    %v1295 = vpop.f32.mrb[0].mxu0
    %v1296 = vadd.f32 %v936, %v1295
    %1297 = vmatprep.mubr.f32.mxu0 %v834
    %1298 = vmatmul.mubr.f32.gmra.mrb[0].mxu0 %v833
    %v1299 = vpop.f32.mrb[0].mxu0
    %v1300 = vadd.f32 %v932, %v1299
    %v1301 = vpop.f32.mrb[0].mxu0
    %v1302 = vadd.f32 %v936, %v1301
    %1303 = vmatprep.mubr.f32.mxu0 %v836
    %1304 = vmatmul.mubr.f32.gmra.mrb[0].mxu0 %v835
    %v1305 = vpop.f32.mrb[0].mxu0
    %v1306 = vadd.f32 %v932, %v1305
    %v1307 = vpop.f32.mrb[0].mxu0
    %v1308 = vadd.f32 %v936, %v1307
    %1309 = vmatprep.mubr.f32.mxu0 %v838
    %1310 = vmatmul.mubr.f32.gmra.mrb[0].mxu0 %v837
    %v1311 = vpop.f32.mrb[0].mxu0
    %v1312 = vadd.f32 %v932, %v1311
    %v1313 = vpop.f32.mrb[0].mxu0
    %v1314 = vadd.f32 %v936, %v1313
    %1315 = vmatprep.mubr.f32.mxu0 %v840
    %1316 = vmatmul.mubr.f32.gmra.mrb[0].mxu0 %v839
    %v1317 = vpop.f32.mrb[0].mxu0
    %v1318 = vadd.f32 %v932, %v1317
    %v1319 = vpop.f32.mrb[0].mxu0
    %v1320 = vadd.f32 %v936, %v1319
    %1321 = vmatprep.mubr.f32.mxu0 %v842
    %1322 = vmatmul.mubr.f32.gmra.mrb[0].mxu0 %v841
    %v1323 = vpop.f32.mrb[0].mxu0
    %v1324 = vadd.f32 %v932, %v1323
    %v1325 = vpop.f32.mrb[0].mxu0
    %v1326 = vadd.f32 %v936, %v1325
    %1327 = vmatprep.mubr.f32.mxu0 %v844
    %1328 = vmatmul.mubr.f32.gmra.mrb[0].mxu0 %v843
    %v1329 = vpop.f32.mrb[0].mxu0
    %v1330 = vadd.f32 %v932, %v1329
    %v1331 = vpop.f32.mrb[0].mxu0
    %v1332 = vadd.f32 %v936, %v1331
    %1333 = vmatprep.mubr.f32.mxu0 %v846
    %1334 = vmatmul.mubr.f32.gmra.mrb[0].mxu0 %v845
    %v1335 = vpop.f32.mrb[0].mxu0
    %v1336 = vadd.f32 %v932, %v1335
    %v1337 = vpop.f32.mrb[0].mxu0
    %v1338 = vadd.f32 %v936, %v1337
    %1339 = vmatprep.mubr.f32.mxu0 %v848
    %1340 = vmatmul.mubr.f32.gmra.mrb[0].mxu0 %v847
    %v1341 = vpop.f32.mrb[0].mxu0
    %v1342 = vadd.f32 %v932, %v1341
    %v1343 = vpop.f32.mrb[0].mxu0
    %v1344 = vadd.f32 %v936, %v1343
    %1345 = vmatprep.mubr.f32.mxu0 %v850
    %1346 = vmatmul.mubr.f32.gmra.mrb[0].mxu0 %v849
    %v1347 = vpop.f32.mrb[0].mxu0
    %v1348 = vadd.f32 %v932, %v1347
    %v1349 = vpop.f32.mrb[0].mxu0
    %v1350 = vadd.f32 %v936, %v1349
    %1351 = vmatprep.mubr.f32.mxu0 %v852
    %1352 = vmatmul.mubr.f32.gmra.mrb[0].mxu0 %v851
    %v1353 = vpop.f32.mrb[0].mxu0
    %v1354 = vadd.f32 %v932, %v1353
    %v1355 = vpop.f32.mrb[0].mxu0
    %v1356 = vadd.f32 %v936, %v1355
    %1357 = vmatprep.mubr.f32.mxu0 %v854
    %1358 = vmatmul.mubr.f32.gmra.mrb[0].mxu0 %v853
    %v1359 = vpop.f32.mrb[0].mxu0
    %v1360 = vadd.f32 %v932, %v1359
    %v1361 = vpop.f32.mrb[0].mxu0
    %v1362 = vadd.f32 %v936, %v1361
    %1363 = vmatprep.mubr.f32.mxu0 %v856
    %1364 = vmatmul.mubr.f32.gmra.mrb[0].mxu0 %v855
    %v1365 = vpop.f32.mrb[0].mxu0
    %v1366 = vadd.f32 %v932, %v1365
    %v1367 = vpop.f32.mrb[0].mxu0
    %v1368 = vadd.f32 %v936, %v1367
    %1369 = vmatprep.mubr.f32.mxu0 %v858
    %1370 = vmatmul.mubr.f32.gmra.mrb[0].mxu0 %v857
    %v1371 = vpop.f32.mrb[0].mxu0
    %v1372 = vadd.f32 %v932, %v1371
    %v1373 = vpop.f32.mrb[0].mxu0
    %v1374 = vadd.f32 %v936, %v1373
    %1375 = vmatprep.mubr.f32.mxu0 %v860
    %1376 = vmatmul.mubr.f32.gmra.mrb[0].mxu0 %v859
    %v1377 = vpop.f32.mrb[0].mxu0
    %v1378 = vadd.f32 %v932, %v1377
    %v1379 = vpop.f32.mrb[0].mxu0
    %v1380 = vadd.f32 %v936, %v1379
    %1381 = vmatprep.mubr.f32.mxu0 %v862
    %1382 = vmatmul.mubr.f32.gmra.mrb[0].mxu0 %v861
    %v1383 = vpop.f32.mrb[0].mxu0
    %v1384 = vadd.f32 %v932, %v1383
    %v1385 = vpop.f32.mrb[0].mxu0
    %v1386 = vadd.f32 %v936, %v1385
    %1387 = vdwg.mxu0
    %v1388 = vmax.f32 %v1006, 0.0
    %v1389 = vmax.f32 %v1008, 0.0
    %v1390 = vmax.f32 %v1012, 0.0
    %v1391 = vmax.f32 %v1014, 0.0
    %v1392 = vmax.f32 %v1018, 0.0
    %v1393 = vmax.f32 %v1020, 0.0
    %v1394 = vmax.f32 %v1024, 0.0
    %v1395 = vmax.f32 %v1026, 0.0
    %v1396 = vmax.f32 %v1030, 0.0
    %v1397 = vmax.f32 %v1032, 0.0
    %v1398 = vmax.f32 %v1036, 0.0
    %v1399 = vmax.f32 %v1038, 0.0
    %v1400 = vmax.f32 %v1042, 0.0
    %v1401 = vmax.f32 %v1044, 0.0
    %v1402 = vmax.f32 %v1048, 0.0
    %v1403 = vmax.f32 %v1050, 0.0
    %v1404 = vmax.f32 %v1054, 0.0
    %v1405 = vmax.f32 %v1056, 0.0
    %v1406 = vmax.f32 %v1060, 0.0
    %v1407 = vmax.f32 %v1062, 0.0
    %v1408 = vmax.f32 %v1066, 0.0
    %v1409 = vmax.f32 %v1068, 0.0
    %v1410 = vmax.f32 %v1072, 0.0
    %v1411 = vmax.f32 %v1074, 0.0
    %v1412 = vmax.f32 %v1078, 0.0
    %v1413 = vmax.f32 %v1080, 0.0
    %v1414 = vmax.f32 %v1084, 0.0
    %v1415 = vmax.f32 %v1086, 0.0
    %v1416 = vmax.f32 %v1090, 0.0
    %v1417 = vmax.f32 %v1092, 0.0
    %v1418 = vmax.f32 %v1096, 0.0
    %v1419 = vmax.f32 %v1098, 0.0
    %v1420 = vmax.f32 %v1102, 0.0
    %v1421 = vmax.f32 %v1104, 0.0
    %v1422 = vmax.f32 %v1108, 0.0
    %v1423 = vmax.f32 %v1110, 0.0
    %v1424 = vmax.f32 %v1114, 0.0
    %v1425 = vmax.f32 %v1116, 0.0
    %v1426 = vmax.f32 %v1120, 0.0
    %v1427 = vmax.f32 %v1122, 0.0
    %v1428 = vmax.f32 %v1126, 0.0
    %v1429 = vmax.f32 %v1128, 0.0
    %v1430 = vmax.f32 %v1132, 0.0
    %v1431 = vmax.f32 %v1134, 0.0
    %v1432 = vmax.f32 %v1138, 0.0
    %v1433 = vmax.f32 %v1140, 0.0
    %v1434 = vmax.f32 %v1144, 0.0
    %v1435 = vmax.f32 %v1146, 0.0
    %v1436 = vmax.f32 %v1150, 0.0
    %v1437 = vmax.f32 %v1152, 0.0
    %v1438 = vmax.f32 %v1156, 0.0
    %v1439 = vmax.f32 %v1158, 0.0
    %v1440 = vmax.f32 %v1162, 0.0
    %v1441 = vmax.f32 %v1164, 0.0
    %v1442 = vmax.f32 %v1168, 0.0
    %v1443 = vmax.f32 %v1170, 0.0
    %v1444 = vmax.f32 %v1174, 0.0
    %v1445 = vmax.f32 %v1176, 0.0
    %v1446 = vmax.f32 %v1180, 0.0
    %v1447 = vmax.f32 %v1182, 0.0
    %v1448 = vmax.f32 %v1186, 0.0
    %v1449 = vmax.f32 %v1188, 0.0
    %v1450 = vmax.f32 %v1192, 0.0
    %v1451 = vmax.f32 %v1194, 0.0
    %v1452 = vmax.f32 %v1198, 0.0
    %v1453 = vmax.f32 %v1200, 0.0
    %v1454 = vmax.f32 %v1204, 0.0
    %v1455 = vmax.f32 %v1206, 0.0
    %v1456 = vmax.f32 %v1210, 0.0
    %v1457 = vmax.f32 %v1212, 0.0
    %v1458 = vmax.f32 %v1216, 0.0
    %v1459 = vmax.f32 %v1218, 0.0
    %v1460 = vmax.f32 %v1222, 0.0
    %v1461 = vmax.f32 %v1224, 0.0
    %v1462 = vmax.f32 %v1228, 0.0
    %v1463 = vmax.f32 %v1230, 0.0
    %v1464 = vmax.f32 %v1234, 0.0
    %v1465 = vmax.f32 %v1236, 0.0
    %v1466 = vmax.f32 %v1240, 0.0
    %v1467 = vmax.f32 %v1242, 0.0
    %v1468 = vmax.f32 %v1246, 0.0
    %v1469 = vmax.f32 %v1248, 0.0
    %v1470 = vmax.f32 %v1252, 0.0
    %v1471 = vmax.f32 %v1254, 0.0
    %v1472 = vmax.f32 %v1258, 0.0
    %v1473 = vmax.f32 %v1260, 0.0
    %v1474 = vmax.f32 %v1264, 0.0
    %v1475 = vmax.f32 %v1266, 0.0
    %v1476 = vmax.f32 %v1270, 0.0
    %v1477 = vmax.f32 %v1272, 0.0
    %v1478 = vmax.f32 %v1276, 0.0
    %v1479 = vmax.f32 %v1278, 0.0
    %v1480 = vmax.f32 %v1282, 0.0
    %v1481 = vmax.f32 %v1284, 0.0
    %v1482 = vmax.f32 %v1288, 0.0
    %v1483 = vmax.f32 %v1290, 0.0
    %v1484 = vmax.f32 %v1294, 0.0
    %v1485 = vmax.f32 %v1296, 0.0
    %v1486 = vmax.f32 %v1300, 0.0
    %v1487 = vmax.f32 %v1302, 0.0
    %v1488 = vmax.f32 %v1306, 0.0
    %v1489 = vmax.f32 %v1308, 0.0
    %v1490 = vmax.f32 %v1312, 0.0
    %v1491 = vmax.f32 %v1314, 0.0
    %v1492 = vmax.f32 %v1318, 0.0
    %v1493 = vmax.f32 %v1320, 0.0
    %v1494 = vmax.f32 %v1324, 0.0
    %v1495 = vmax.f32 %v1326, 0.0
    %v1496 = vmax.f32 %v1330, 0.0
    %v1497 = vmax.f32 %v1332, 0.0
    %v1498 = vmax.f32 %v1336, 0.0
    %v1499 = vmax.f32 %v1338, 0.0
    %v1500 = vmax.f32 %v1342, 0.0
    %v1501 = vmax.f32 %v1344, 0.0
    %v1502 = vmax.f32 %v1348, 0.0
    %v1503 = vmax.f32 %v1350, 0.0
    %v1504 = vmax.f32 %v1354, 0.0
    %v1505 = vmax.f32 %v1356, 0.0
    %v1506 = vmax.f32 %v1360, 0.0
    %v1507 = vmax.f32 %v1362, 0.0
    %v1508 = vmax.f32 %v1366, 0.0
    %v1509 = vmax.f32 %v1368, 0.0
    %v1510 = vmax.f32 %v1372, 0.0
    %v1511 = vmax.f32 %v1374, 0.0
    %v1512 = vmax.f32 %v1378, 0.0
    %v1513 = vmax.f32 %v1380, 0.0
    %v1514 = vmax.f32 %v1384, 0.0
    %v1515 = vmax.f32 %v1386, 0.0
    %v1516 = vld [vmem:[#allocation8] sm:$0xff]
    %v1517 = vld [vmem:[#allocation8 + $0x8] sm:$0xff]
    %v1518 = vld [vmem:[#allocation8 + $0x10] sm:$0xff]
    %v1519 = vld [vmem:[#allocation8 + $0x18] sm:$0xff]
    %v1520 = vld [vmem:[#allocation8 + $0x20] sm:$0xff]
    %v1521 = vld [vmem:[#allocation8 + $0x28] sm:$0xff]
    %v1522 = vld [vmem:[#allocation8 + $0x30] sm:$0xff]
    %v1523 = vld [vmem:[#allocation8 + $0x38] sm:$0xff]
    %v1524 = vld [vmem:[#allocation8 + $0x40] sm:$0xff]
    %v1525 = vld [vmem:[#allocation8 + $0x48] sm:$0xff]
    %v1526 = vld [vmem:[#allocation8 + $0x50] sm:$0xff]
    %v1527 = vld [vmem:[#allocation8 + $0x58] sm:$0xff]
    %v1528 = vld [vmem:[#allocation8 + $0x60] sm:$0xff]
    %v1529 = vld [vmem:[#allocation8 + $0x68] sm:$0xff]
    %v1530 = vld [vmem:[#allocation8 + $0x70] sm:$0xff]
    %v1531 = vld [vmem:[#allocation8 + $0x78] sm:$0xff]
    %v1532 = vld [vmem:[#allocation8 + $0x80] sm:$0xff]
    %v1533 = vld [vmem:[#allocation8 + $0x88] sm:$0xff]
    %v1534 = vld [vmem:[#allocation8 + $0x90] sm:$0xff]
    %v1535 = vld [vmem:[#allocation8 + $0x98] sm:$0xff]
    %v1536 = vld [vmem:[#allocation8 + $0xa0] sm:$0xff]
    %v1537 = vld [vmem:[#allocation8 + $0xa8] sm:$0xff]
    %v1538 = vld [vmem:[#allocation8 + $0xb0] sm:$0xff]
    %v1539 = vld [vmem:[#allocation8 + $0xb8] sm:$0xff]
    %v1540 = vld [vmem:[#allocation8 + $0xc0] sm:$0xff]
    %v1541 = vld [vmem:[#allocation8 + $0xc8] sm:$0xff]
    %v1542 = vld [vmem:[#allocation8 + $0xd0] sm:$0xff]
    %v1543 = vld [vmem:[#allocation8 + $0xd8] sm:$0xff]
    %v1544 = vld [vmem:[#allocation8 + $0xe0] sm:$0xff]
    %v1545 = vld [vmem:[#allocation8 + $0xe8] sm:$0xff]
    %v1546 = vld [vmem:[#allocation8 + $0xf0] sm:$0xff]
    %v1547 = vld [vmem:[#allocation8 + $0xf8] sm:$0xff]
    %v1548 = vld [vmem:[%s6] sm:$0x1]
    %v1550 = vlaneseq
    %v1551 = vshrl.u32 %v1550, 7
    %v1552 = vsub.s32 0, %v1551
    %v1553 = vrot.slane %v1548, %v1552
    %1555 = vmatprep.subr.mxu0 0.0
    %1556 = vmatpush1.msra.mxu0 %v1516
    %1557 = vmatprep.subr.mxu0 0.0
    %1558 = vmatpush1.msra.mxu0 %v1517
    %1559 = vmatprep.subr.mxu0 0.0
    %1560 = vmatpush1.msra.mxu0 %v1518
    %1561 = vmatprep.subr.mxu0 0.0
    %1562 = vmatpush1.msra.mxu0 %v1519
    %1563 = vmatprep.subr.mxu0 0.0
    %1564 = vmatpush1.msra.mxu0 %v1520
    %1565 = vmatprep.subr.mxu0 0.0
    %1566 = vmatpush1.msra.mxu0 %v1521
    %1567 = vmatprep.subr.mxu0 0.0
    %1568 = vmatpush1.msra.mxu0 %v1522
    %1569 = vmatprep.subr.mxu0 0.0
    %1570 = vmatpush1.msra.mxu0 %v1523
    %1571 = vmatprep.subr.mxu0 0.0
    %1572 = vmatpush1.msra.mxu0 %v1524
    %1573 = vmatprep.subr.mxu0 0.0
    %1574 = vmatpush1.msra.mxu0 %v1525
    %1575 = vmatprep.subr.mxu0 0.0
    %1576 = vmatpush1.msra.mxu0 %v1526
    %1577 = vmatprep.subr.mxu0 0.0
    %1578 = vmatpush1.msra.mxu0 %v1527
    %1579 = vmatprep.subr.mxu0 0.0
    %1580 = vmatpush1.msra.mxu0 %v1528
    %1581 = vmatprep.subr.mxu0 0.0
    %1582 = vmatpush1.msra.mxu0 %v1529
    %1583 = vmatprep.subr.mxu0 0.0
    %1584 = vmatpush1.msra.mxu0 %v1530
    %1585 = vmatprep.subr.mxu0 0.0
    %1586 = vmatpush1.msra.mxu0 %v1531
    %1587 = vmatprep.subr.mxu0 0.0
    %1588 = vmatpush1.msra.mxu0 %v1532
    %1589 = vmatprep.subr.mxu0 0.0
    %1590 = vmatpush1.msra.mxu0 %v1533
    %1591 = vmatprep.subr.mxu0 0.0
    %1592 = vmatpush1.msra.mxu0 %v1534
    %1593 = vmatprep.subr.mxu0 0.0
    %1594 = vmatpush1.msra.mxu0 %v1535
    %1595 = vmatprep.subr.mxu0 0.0
    %1596 = vmatpush1.msra.mxu0 %v1536
    %1597 = vmatprep.subr.mxu0 0.0
    %1598 = vmatpush1.msra.mxu0 %v1537
    %1599 = vmatprep.subr.mxu0 0.0
    %1600 = vmatpush1.msra.mxu0 %v1538
    %1601 = vmatprep.subr.mxu0 0.0
    %1602 = vmatpush1.msra.mxu0 %v1539
    %1603 = vmatprep.subr.mxu0 0.0
    %1604 = vmatpush1.msra.mxu0 %v1540
    %1605 = vmatprep.subr.mxu0 0.0
    %1606 = vmatpush1.msra.mxu0 %v1541
    %1607 = vmatprep.subr.mxu0 0.0
    %1608 = vmatpush1.msra.mxu0 %v1542
    %1609 = vmatprep.subr.mxu0 0.0
    %1610 = vmatpush1.msra.mxu0 %v1543
    %1611 = vmatprep.subr.mxu0 0.0
    %1612 = vmatpush1.msra.mxu0 %v1544
    %1613 = vmatprep.subr.mxu0 0.0
    %1614 = vmatpush1.msra.mxu0 %v1545
    %1615 = vmatprep.subr.mxu0 0.0
    %1616 = vmatpush1.msra.mxu0 %v1546
    %1617 = vmatprep.subr.mxu0 0.0
    %1618 = vmatpush1.msra.mxu0 %v1547
    %1619 = vmatprep.mubr.f32.mxu0 %v1389
    %1620 = vmatmul.mubr.f32.gmra.mrb[0].mxu0 %v1388
    %v1621 = vpop.f32.mrb[0].mxu0
    %v1622 = vadd.f32 %v1553, %v1621
    %v1623 = vpop.f32.mrb[0].mxu0
    %1624 = vmatprep.mubr.f32.mxu0 %v1391
    %1625 = vmatmul.mubr.f32.gmra.mrb[0].mxu0 %v1390
    %v1626 = vpop.f32.mrb[0].mxu0
    %v1627 = vadd.f32 %v1553, %v1626
    %v1628 = vpop.f32.mrb[0].mxu0
    %1629 = vmatprep.mubr.f32.mxu0 %v1393
    %1630 = vmatmul.mubr.f32.gmra.mrb[0].mxu0 %v1392
    %v1631 = vpop.f32.mrb[0].mxu0
    %v1632 = vadd.f32 %v1553, %v1631
    %v1633 = vpop.f32.mrb[0].mxu0
    %1634 = vmatprep.mubr.f32.mxu0 %v1395
    %1635 = vmatmul.mubr.f32.gmra.mrb[0].mxu0 %v1394
    %v1636 = vpop.f32.mrb[0].mxu0
    %v1637 = vadd.f32 %v1553, %v1636
    %v1638 = vpop.f32.mrb[0].mxu0
    %1639 = vmatprep.mubr.f32.mxu0 %v1397
    %1640 = vmatmul.mubr.f32.gmra.mrb[0].mxu0 %v1396
    %v1641 = vpop.f32.mrb[0].mxu0
    %v1642 = vadd.f32 %v1553, %v1641
    %v1643 = vpop.f32.mrb[0].mxu0
    %1644 = vmatprep.mubr.f32.mxu0 %v1399
    %1645 = vmatmul.mubr.f32.gmra.mrb[0].mxu0 %v1398
    %v1646 = vpop.f32.mrb[0].mxu0
    %v1647 = vadd.f32 %v1553, %v1646
    %v1648 = vpop.f32.mrb[0].mxu0
    %1649 = vmatprep.mubr.f32.mxu0 %v1401
    %1650 = vmatmul.mubr.f32.gmra.mrb[0].mxu0 %v1400
    %v1651 = vpop.f32.mrb[0].mxu0
    %v1652 = vadd.f32 %v1553, %v1651
    %v1653 = vpop.f32.mrb[0].mxu0
    %1654 = vmatprep.mubr.f32.mxu0 %v1403
    %1655 = vmatmul.mubr.f32.gmra.mrb[0].mxu0 %v1402
    %v1656 = vpop.f32.mrb[0].mxu0
    %v1657 = vadd.f32 %v1553, %v1656
    %v1658 = vpop.f32.mrb[0].mxu0
    %1659 = vmatprep.mubr.f32.mxu0 %v1405
    %1660 = vmatmul.mubr.f32.gmra.mrb[0].mxu0 %v1404
    %v1661 = vpop.f32.mrb[0].mxu0
    %v1662 = vadd.f32 %v1553, %v1661
    %v1663 = vpop.f32.mrb[0].mxu0
    %1664 = vmatprep.mubr.f32.mxu0 %v1407
    %1665 = vmatmul.mubr.f32.gmra.mrb[0].mxu0 %v1406
    %v1666 = vpop.f32.mrb[0].mxu0
    %v1667 = vadd.f32 %v1553, %v1666
    %v1668 = vpop.f32.mrb[0].mxu0
    %1669 = vmatprep.mubr.f32.mxu0 %v1409
    %1670 = vmatmul.mubr.f32.gmra.mrb[0].mxu0 %v1408
    %v1671 = vpop.f32.mrb[0].mxu0
    %v1672 = vadd.f32 %v1553, %v1671
    %v1673 = vpop.f32.mrb[0].mxu0
    %1674 = vmatprep.mubr.f32.mxu0 %v1411
    %1675 = vmatmul.mubr.f32.gmra.mrb[0].mxu0 %v1410
    %v1676 = vpop.f32.mrb[0].mxu0
    %v1677 = vadd.f32 %v1553, %v1676
    %v1678 = vpop.f32.mrb[0].mxu0
    %1679 = vmatprep.mubr.f32.mxu0 %v1413
    %1680 = vmatmul.mubr.f32.gmra.mrb[0].mxu0 %v1412
    %v1681 = vpop.f32.mrb[0].mxu0
    %v1682 = vadd.f32 %v1553, %v1681
    %v1683 = vpop.f32.mrb[0].mxu0
    %1684 = vmatprep.mubr.f32.mxu0 %v1415
    %1685 = vmatmul.mubr.f32.gmra.mrb[0].mxu0 %v1414
    %v1686 = vpop.f32.mrb[0].mxu0
    %v1687 = vadd.f32 %v1553, %v1686
    %v1688 = vpop.f32.mrb[0].mxu0
    %1689 = vmatprep.mubr.f32.mxu0 %v1417
    %1690 = vmatmul.mubr.f32.gmra.mrb[0].mxu0 %v1416
    %v1691 = vpop.f32.mrb[0].mxu0
    %v1692 = vadd.f32 %v1553, %v1691
    %v1693 = vpop.f32.mrb[0].mxu0
    %1694 = vmatprep.mubr.f32.mxu0 %v1419
    %1695 = vmatmul.mubr.f32.gmra.mrb[0].mxu0 %v1418
    %v1696 = vpop.f32.mrb[0].mxu0
    %v1697 = vadd.f32 %v1553, %v1696
    %v1698 = vpop.f32.mrb[0].mxu0
    %1699 = vmatprep.mubr.f32.mxu0 %v1421
    %1700 = vmatmul.mubr.f32.gmra.mrb[0].mxu0 %v1420
    %v1701 = vpop.f32.mrb[0].mxu0
    %v1702 = vadd.f32 %v1553, %v1701
    %v1703 = vpop.f32.mrb[0].mxu0
    %1704 = vmatprep.mubr.f32.mxu0 %v1423
    %1705 = vmatmul.mubr.f32.gmra.mrb[0].mxu0 %v1422
    %v1706 = vpop.f32.mrb[0].mxu0
    %v1707 = vadd.f32 %v1553, %v1706
    %v1708 = vpop.f32.mrb[0].mxu0
    %1709 = vmatprep.mubr.f32.mxu0 %v1425
    %1710 = vmatmul.mubr.f32.gmra.mrb[0].mxu0 %v1424
    %v1711 = vpop.f32.mrb[0].mxu0
    %v1712 = vadd.f32 %v1553, %v1711
    %v1713 = vpop.f32.mrb[0].mxu0
    %1714 = vmatprep.mubr.f32.mxu0 %v1427
    %1715 = vmatmul.mubr.f32.gmra.mrb[0].mxu0 %v1426
    %v1716 = vpop.f32.mrb[0].mxu0
    %v1717 = vadd.f32 %v1553, %v1716
    %v1718 = vpop.f32.mrb[0].mxu0
    %1719 = vmatprep.mubr.f32.mxu0 %v1429
    %1720 = vmatmul.mubr.f32.gmra.mrb[0].mxu0 %v1428
    %v1721 = vpop.f32.mrb[0].mxu0
    %v1722 = vadd.f32 %v1553, %v1721
    %v1723 = vpop.f32.mrb[0].mxu0
    %1724 = vmatprep.mubr.f32.mxu0 %v1431
    %1725 = vmatmul.mubr.f32.gmra.mrb[0].mxu0 %v1430
    %v1726 = vpop.f32.mrb[0].mxu0
    %v1727 = vadd.f32 %v1553, %v1726
    %v1728 = vpop.f32.mrb[0].mxu0
    %1729 = vmatprep.mubr.f32.mxu0 %v1433
    %1730 = vmatmul.mubr.f32.gmra.mrb[0].mxu0 %v1432
    %v1731 = vpop.f32.mrb[0].mxu0
    %v1732 = vadd.f32 %v1553, %v1731
    %v1733 = vpop.f32.mrb[0].mxu0
    %1734 = vmatprep.mubr.f32.mxu0 %v1435
    %1735 = vmatmul.mubr.f32.gmra.mrb[0].mxu0 %v1434
    %v1736 = vpop.f32.mrb[0].mxu0
    %v1737 = vadd.f32 %v1553, %v1736
    %v1738 = vpop.f32.mrb[0].mxu0
    %1739 = vmatprep.mubr.f32.mxu0 %v1437
    %1740 = vmatmul.mubr.f32.gmra.mrb[0].mxu0 %v1436
    %v1741 = vpop.f32.mrb[0].mxu0
    %v1742 = vadd.f32 %v1553, %v1741
    %v1743 = vpop.f32.mrb[0].mxu0
    %1744 = vmatprep.mubr.f32.mxu0 %v1439
    %1745 = vmatmul.mubr.f32.gmra.mrb[0].mxu0 %v1438
    %v1746 = vpop.f32.mrb[0].mxu0
    %v1747 = vadd.f32 %v1553, %v1746
    %v1748 = vpop.f32.mrb[0].mxu0
    %1749 = vmatprep.mubr.f32.mxu0 %v1441
    %1750 = vmatmul.mubr.f32.gmra.mrb[0].mxu0 %v1440
    %v1751 = vpop.f32.mrb[0].mxu0
    %v1752 = vadd.f32 %v1553, %v1751
    %v1753 = vpop.f32.mrb[0].mxu0
    %1754 = vmatprep.mubr.f32.mxu0 %v1443
    %1755 = vmatmul.mubr.f32.gmra.mrb[0].mxu0 %v1442
    %v1756 = vpop.f32.mrb[0].mxu0
    %v1757 = vadd.f32 %v1553, %v1756
    %v1758 = vpop.f32.mrb[0].mxu0
    %1759 = vmatprep.mubr.f32.mxu0 %v1445
    %1760 = vmatmul.mubr.f32.gmra.mrb[0].mxu0 %v1444
    %v1761 = vpop.f32.mrb[0].mxu0
    %v1762 = vadd.f32 %v1553, %v1761
    %v1763 = vpop.f32.mrb[0].mxu0
    %1764 = vmatprep.mubr.f32.mxu0 %v1447
    %1765 = vmatmul.mubr.f32.gmra.mrb[0].mxu0 %v1446
    %v1766 = vpop.f32.mrb[0].mxu0
    %v1767 = vadd.f32 %v1553, %v1766
    %v1768 = vpop.f32.mrb[0].mxu0
    %1769 = vmatprep.mubr.f32.mxu0 %v1449
    %1770 = vmatmul.mubr.f32.gmra.mrb[0].mxu0 %v1448
    %v1771 = vpop.f32.mrb[0].mxu0
    %v1772 = vadd.f32 %v1553, %v1771
    %v1773 = vpop.f32.mrb[0].mxu0
    %1774 = vmatprep.mubr.f32.mxu0 %v1451
    %1775 = vmatmul.mubr.f32.gmra.mrb[0].mxu0 %v1450
    %v1776 = vpop.f32.mrb[0].mxu0
    %v1777 = vadd.f32 %v1553, %v1776
    %v1778 = vpop.f32.mrb[0].mxu0
    %1779 = vmatprep.mubr.f32.mxu0 %v1453
    %1780 = vmatmul.mubr.f32.gmra.mrb[0].mxu0 %v1452
    %v1781 = vpop.f32.mrb[0].mxu0
    %v1782 = vadd.f32 %v1553, %v1781
    %v1783 = vpop.f32.mrb[0].mxu0
    %1784 = vmatprep.mubr.f32.mxu0 %v1455
    %1785 = vmatmul.mubr.f32.gmra.mrb[0].mxu0 %v1454
    %v1786 = vpop.f32.mrb[0].mxu0
    %v1787 = vadd.f32 %v1553, %v1786
    %v1788 = vpop.f32.mrb[0].mxu0
    %1789 = vmatprep.mubr.f32.mxu0 %v1457
    %1790 = vmatmul.mubr.f32.gmra.mrb[0].mxu0 %v1456
    %v1791 = vpop.f32.mrb[0].mxu0
    %v1792 = vadd.f32 %v1553, %v1791
    %v1793 = vpop.f32.mrb[0].mxu0
    %1794 = vmatprep.mubr.f32.mxu0 %v1459
    %1795 = vmatmul.mubr.f32.gmra.mrb[0].mxu0 %v1458
    %v1796 = vpop.f32.mrb[0].mxu0
    %v1797 = vadd.f32 %v1553, %v1796
    %v1798 = vpop.f32.mrb[0].mxu0
    %1799 = vmatprep.mubr.f32.mxu0 %v1461
    %1800 = vmatmul.mubr.f32.gmra.mrb[0].mxu0 %v1460
    %v1801 = vpop.f32.mrb[0].mxu0
    %v1802 = vadd.f32 %v1553, %v1801
    %v1803 = vpop.f32.mrb[0].mxu0
    %1804 = vmatprep.mubr.f32.mxu0 %v1463
    %1805 = vmatmul.mubr.f32.gmra.mrb[0].mxu0 %v1462
    %v1806 = vpop.f32.mrb[0].mxu0
    %v1807 = vadd.f32 %v1553, %v1806
    %v1808 = vpop.f32.mrb[0].mxu0
    %1809 = vmatprep.mubr.f32.mxu0 %v1465
    %1810 = vmatmul.mubr.f32.gmra.mrb[0].mxu0 %v1464
    %v1811 = vpop.f32.mrb[0].mxu0
    %v1812 = vadd.f32 %v1553, %v1811
    %v1813 = vpop.f32.mrb[0].mxu0
    %1814 = vmatprep.mubr.f32.mxu0 %v1467
    %1815 = vmatmul.mubr.f32.gmra.mrb[0].mxu0 %v1466
    %v1816 = vpop.f32.mrb[0].mxu0
    %v1817 = vadd.f32 %v1553, %v1816
    %v1818 = vpop.f32.mrb[0].mxu0
    %1819 = vmatprep.mubr.f32.mxu0 %v1469
    %1820 = vmatmul.mubr.f32.gmra.mrb[0].mxu0 %v1468
    %v1821 = vpop.f32.mrb[0].mxu0
    %v1822 = vadd.f32 %v1553, %v1821
    %v1823 = vpop.f32.mrb[0].mxu0
    %1824 = vmatprep.mubr.f32.mxu0 %v1471
    %1825 = vmatmul.mubr.f32.gmra.mrb[0].mxu0 %v1470
    %v1826 = vpop.f32.mrb[0].mxu0
    %v1827 = vadd.f32 %v1553, %v1826
    %v1828 = vpop.f32.mrb[0].mxu0
    %1829 = vmatprep.mubr.f32.mxu0 %v1473
    %1830 = vmatmul.mubr.f32.gmra.mrb[0].mxu0 %v1472
    %v1831 = vpop.f32.mrb[0].mxu0
    %v1832 = vadd.f32 %v1553, %v1831
    %v1833 = vpop.f32.mrb[0].mxu0
    %1834 = vmatprep.mubr.f32.mxu0 %v1475
    %1835 = vmatmul.mubr.f32.gmra.mrb[0].mxu0 %v1474
    %v1836 = vpop.f32.mrb[0].mxu0
    %v1837 = vadd.f32 %v1553, %v1836
    %v1838 = vpop.f32.mrb[0].mxu0
    %1839 = vmatprep.mubr.f32.mxu0 %v1477
    %1840 = vmatmul.mubr.f32.gmra.mrb[0].mxu0 %v1476
    %v1841 = vpop.f32.mrb[0].mxu0
    %v1842 = vadd.f32 %v1553, %v1841
    %v1843 = vpop.f32.mrb[0].mxu0
    %1844 = vmatprep.mubr.f32.mxu0 %v1479
    %1845 = vmatmul.mubr.f32.gmra.mrb[0].mxu0 %v1478
    %v1846 = vpop.f32.mrb[0].mxu0
    %v1847 = vadd.f32 %v1553, %v1846
    %v1848 = vpop.f32.mrb[0].mxu0
    %1849 = vmatprep.mubr.f32.mxu0 %v1481
    %1850 = vmatmul.mubr.f32.gmra.mrb[0].mxu0 %v1480
    %v1851 = vpop.f32.mrb[0].mxu0
    %v1852 = vadd.f32 %v1553, %v1851
    %v1853 = vpop.f32.mrb[0].mxu0
    %1854 = vmatprep.mubr.f32.mxu0 %v1483
    %1855 = vmatmul.mubr.f32.gmra.mrb[0].mxu0 %v1482
    %v1856 = vpop.f32.mrb[0].mxu0
    %v1857 = vadd.f32 %v1553, %v1856
    %v1858 = vpop.f32.mrb[0].mxu0
    %1859 = vmatprep.mubr.f32.mxu0 %v1485
    %1860 = vmatmul.mubr.f32.gmra.mrb[0].mxu0 %v1484
    %v1861 = vpop.f32.mrb[0].mxu0
    %v1862 = vadd.f32 %v1553, %v1861
    %v1863 = vpop.f32.mrb[0].mxu0
    %1864 = vmatprep.mubr.f32.mxu0 %v1487
    %1865 = vmatmul.mubr.f32.gmra.mrb[0].mxu0 %v1486
    %v1866 = vpop.f32.mrb[0].mxu0
    %v1867 = vadd.f32 %v1553, %v1866
    %v1868 = vpop.f32.mrb[0].mxu0
    %1869 = vmatprep.mubr.f32.mxu0 %v1489
    %1870 = vmatmul.mubr.f32.gmra.mrb[0].mxu0 %v1488
    %v1871 = vpop.f32.mrb[0].mxu0
    %v1872 = vadd.f32 %v1553, %v1871
    %v1873 = vpop.f32.mrb[0].mxu0
    %1874 = vmatprep.mubr.f32.mxu0 %v1491
    %1875 = vmatmul.mubr.f32.gmra.mrb[0].mxu0 %v1490
    %v1876 = vpop.f32.mrb[0].mxu0
    %v1877 = vadd.f32 %v1553, %v1876
    %v1878 = vpop.f32.mrb[0].mxu0
    %1879 = vmatprep.mubr.f32.mxu0 %v1493
    %1880 = vmatmul.mubr.f32.gmra.mrb[0].mxu0 %v1492
    %v1881 = vpop.f32.mrb[0].mxu0
    %v1882 = vadd.f32 %v1553, %v1881
    %v1883 = vpop.f32.mrb[0].mxu0
    %1884 = vmatprep.mubr.f32.mxu0 %v1495
    %1885 = vmatmul.mubr.f32.gmra.mrb[0].mxu0 %v1494
    %v1886 = vpop.f32.mrb[0].mxu0
    %v1887 = vadd.f32 %v1553, %v1886
    %v1888 = vpop.f32.mrb[0].mxu0
    %1889 = vmatprep.mubr.f32.mxu0 %v1497
    %1890 = vmatmul.mubr.f32.gmra.mrb[0].mxu0 %v1496
    %v1891 = vpop.f32.mrb[0].mxu0
    %v1892 = vadd.f32 %v1553, %v1891
    %v1893 = vpop.f32.mrb[0].mxu0
    %1894 = vmatprep.mubr.f32.mxu0 %v1499
    %1895 = vmatmul.mubr.f32.gmra.mrb[0].mxu0 %v1498
    %v1896 = vpop.f32.mrb[0].mxu0
    %v1897 = vadd.f32 %v1553, %v1896
    %v1898 = vpop.f32.mrb[0].mxu0
    %1899 = vmatprep.mubr.f32.mxu0 %v1501
    %1900 = vmatmul.mubr.f32.gmra.mrb[0].mxu0 %v1500
    %v1901 = vpop.f32.mrb[0].mxu0
    %v1902 = vadd.f32 %v1553, %v1901
    %v1903 = vpop.f32.mrb[0].mxu0
    %1904 = vmatprep.mubr.f32.mxu0 %v1503
    %1905 = vmatmul.mubr.f32.gmra.mrb[0].mxu0 %v1502
    %v1906 = vpop.f32.mrb[0].mxu0
    %v1907 = vadd.f32 %v1553, %v1906
    %v1908 = vpop.f32.mrb[0].mxu0
    %1909 = vmatprep.mubr.f32.mxu0 %v1505
    %1910 = vmatmul.mubr.f32.gmra.mrb[0].mxu0 %v1504
    %v1911 = vpop.f32.mrb[0].mxu0
    %v1912 = vadd.f32 %v1553, %v1911
    %v1913 = vpop.f32.mrb[0].mxu0
    %1914 = vmatprep.mubr.f32.mxu0 %v1507
    %1915 = vmatmul.mubr.f32.gmra.mrb[0].mxu0 %v1506
    %v1916 = vpop.f32.mrb[0].mxu0
    %v1917 = vadd.f32 %v1553, %v1916
    %v1918 = vpop.f32.mrb[0].mxu0
    %1919 = vmatprep.mubr.f32.mxu0 %v1509
    %1920 = vmatmul.mubr.f32.gmra.mrb[0].mxu0 %v1508
    %v1921 = vpop.f32.mrb[0].mxu0
    %v1922 = vadd.f32 %v1553, %v1921
    %v1923 = vpop.f32.mrb[0].mxu0
    %1924 = vmatprep.mubr.f32.mxu0 %v1511
    %1925 = vmatmul.mubr.f32.gmra.mrb[0].mxu0 %v1510
    %v1926 = vpop.f32.mrb[0].mxu0
    %v1927 = vadd.f32 %v1553, %v1926
    %v1928 = vpop.f32.mrb[0].mxu0
    %1929 = vmatprep.mubr.f32.mxu0 %v1513
    %1930 = vmatmul.mubr.f32.gmra.mrb[0].mxu0 %v1512
    %v1931 = vpop.f32.mrb[0].mxu0
    %v1932 = vadd.f32 %v1553, %v1931
    %v1933 = vpop.f32.mrb[0].mxu0
    %1934 = vmatprep.mubr.f32.mxu0 %v1515
    %1935 = vmatmul.mubr.f32.gmra.mrb[0].mxu0 %v1514
    %v1936 = vpop.f32.mrb[0].mxu0
    %v1937 = vadd.f32 %v1553, %v1936
    %v1938 = vpop.f32.mrb[0].mxu0
    %1939 = vdwg.mxu0
    %1940 = vst [vmem:[#allocation10] sm:$0xff] %v1622
    %1941 = vst [vmem:[#allocation10 + $0x8] sm:$0xff] %v1627
    %1942 = vst [vmem:[#allocation10 + $0x10] sm:$0xff] %v1632
    %1943 = vst [vmem:[#allocation10 + $0x18] sm:$0xff] %v1637
    %1944 = vst [vmem:[#allocation10 + $0x20] sm:$0xff] %v1642
    %1945 = vst [vmem:[#allocation10 + $0x28] sm:$0xff] %v1647
    %1946 = vst [vmem:[#allocation10 + $0x30] sm:$0xff] %v1652
    %1947 = vst [vmem:[#allocation10 + $0x38] sm:$0xff] %v1657
    %1948 = vst [vmem:[#allocation10 + $0x40] sm:$0xff] %v1662
    %1949 = vst [vmem:[#allocation10 + $0x48] sm:$0xff] %v1667
    %1950 = vst [vmem:[#allocation10 + $0x50] sm:$0xff] %v1672
    %1951 = vst [vmem:[#allocation10 + $0x58] sm:$0xff] %v1677
    %1952 = vst [vmem:[#allocation10 + $0x60] sm:$0xff] %v1682
    %1953 = vst [vmem:[#allocation10 + $0x68] sm:$0xff] %v1687
    %1954 = vst [vmem:[#allocation10 + $0x70] sm:$0xff] %v1692
    %1955 = vst [vmem:[#allocation10 + $0x78] sm:$0xff] %v1697
    %1956 = vst [vmem:[#allocation10 + $0x80] sm:$0xff] %v1702
    %1957 = vst [vmem:[#allocation10 + $0x88] sm:$0xff] %v1707
    %1958 = vst [vmem:[#allocation10 + $0x90] sm:$0xff] %v1712
    %1959 = vst [vmem:[#allocation10 + $0x98] sm:$0xff] %v1717
    %1960 = vst [vmem:[#allocation10 + $0xa0] sm:$0xff] %v1722
    %1961 = vst [vmem:[#allocation10 + $0xa8] sm:$0xff] %v1727
    %1962 = vst [vmem:[#allocation10 + $0xb0] sm:$0xff] %v1732
    %1963 = vst [vmem:[#allocation10 + $0xb8] sm:$0xff] %v1737
    %1964 = vst [vmem:[#allocation10 + $0xc0] sm:$0xff] %v1742
    %1965 = vst [vmem:[#allocation10 + $0xc8] sm:$0xff] %v1747
    %1966 = vst [vmem:[#allocation10 + $0xd0] sm:$0xff] %v1752
    %1967 = vst [vmem:[#allocation10 + $0xd8] sm:$0xff] %v1757
    %1968 = vst [vmem:[#allocation10 + $0xe0] sm:$0xff] %v1762
    %1969 = vst [vmem:[#allocation10 + $0xe8] sm:$0xff] %v1767
    %1970 = vst [vmem:[#allocation10 + $0xf0] sm:$0xff] %v1772
    %1971 = vst [vmem:[#allocation10 + $0xf8] sm:$0xff] %v1777
    %1972 = vst [vmem:[#allocation10 + $0x100] sm:$0xff] %v1782
    %1973 = vst [vmem:[#allocation10 + $0x108] sm:$0xff] %v1787
    %1974 = vst [vmem:[#allocation10 + $0x110] sm:$0xff] %v1792
    %1975 = vst [vmem:[#allocation10 + $0x118] sm:$0xff] %v1797
    %1976 = vst [vmem:[#allocation10 + $0x120] sm:$0xff] %v1802
    %1977 = vst [vmem:[#allocation10 + $0x128] sm:$0xff] %v1807
    %1978 = vst [vmem:[#allocation10 + $0x130] sm:$0xff] %v1812
    %1979 = vst [vmem:[#allocation10 + $0x138] sm:$0xff] %v1817
    %1980 = vst [vmem:[#allocation10 + $0x140] sm:$0xff] %v1822
    %1981 = vst [vmem:[#allocation10 + $0x148] sm:$0xff] %v1827
    %1982 = vst [vmem:[#allocation10 + $0x150] sm:$0xff] %v1832
    %1983 = vst [vmem:[#allocation10 + $0x158] sm:$0xff] %v1837
    %1984 = vst [vmem:[#allocation10 + $0x160] sm:$0xff] %v1842
    %1985 = vst [vmem:[#allocation10 + $0x168] sm:$0xff] %v1847
    %1986 = vst [vmem:[#allocation10 + $0x170] sm:$0xff] %v1852
    %1987 = vst [vmem:[#allocation10 + $0x178] sm:$0xff] %v1857
    %1988 = vst [vmem:[#allocation10 + $0x180] sm:$0xff] %v1862
    %1989 = vst [vmem:[#allocation10 + $0x188] sm:$0xff] %v1867
    %1990 = vst [vmem:[#allocation10 + $0x190] sm:$0xff] %v1872
    %1991 = vst [vmem:[#allocation10 + $0x198] sm:$0xff] %v1877
    %1992 = vst [vmem:[#allocation10 + $0x1a0] sm:$0xff] %v1882
    %1993 = vst [vmem:[#allocation10 + $0x1a8] sm:$0xff] %v1887
    %1994 = vst [vmem:[#allocation10 + $0x1b0] sm:$0xff] %v1892
    %1995 = vst [vmem:[#allocation10 + $0x1b8] sm:$0xff] %v1897
    %1996 = vst [vmem:[#allocation10 + $0x1c0] sm:$0xff] %v1902
    %1997 = vst [vmem:[#allocation10 + $0x1c8] sm:$0xff] %v1907
    %1998 = vst [vmem:[#allocation10 + $0x1d0] sm:$0xff] %v1912
    %1999 = vst [vmem:[#allocation10 + $0x1d8] sm:$0xff] %v1917
    %2000 = vst [vmem:[#allocation10 + $0x1e0] sm:$0xff] %v1922
    %2001 = vst [vmem:[#allocation10 + $0x1e8] sm:$0xff] %v1927
    %2002 = vst [vmem:[#allocation10 + $0x1f0] sm:$0xff] %v1932
    %2003 = vst [vmem:[#allocation10 + $0x1f8] sm:$0xff] %v1937
    // Predicated region
    $region46: #{tpu_custom_call.1} parent=1 // pred_check
      _
    $region47: #{tpu_custom_call.1} parent=1 // pred_check_branch
      %2005 = sbr.rel (0) target = $region49
    $region48: #{tpu_custom_call.1} parent=1 // pred_region
      %s2007 = ssub.s32 8192, 8192
      %2008 = vsyncadd [#allocation4], %s2007
      %s2009 = sshll.u32 [#allocation10], 4
      %s2010 = int_to_ptr.vmem [resolvable:$true] %s2009
      %2015 = dma.vmem_to_hbm [thread:$0]  %s2010, 8192, %s7, [#allocation4], 128, 128, 8
    $region49: #{tpu_custom_call.1} parent=1 // pred_fallthru
      _
    // Predicated region
    $region50: #{tpu_custom_call.1} parent=1 // pred_check
      _
    $region51: #{tpu_custom_call.1} parent=1 // pred_check_branch
      %2017 = sbr.rel (0) target = $region53
    $region52: #{tpu_custom_call.1} parent=1 // pred_region
      %2018 = dma.done [#allocation4], 8192
    $region53: #{tpu_custom_call.1} parent=1 // pred_fallthru
      _
    %2019 = vsyncpa [#allocation3], 1
    %2020 = vsyncpa [#allocation6], 1
    %2021 = vsyncpa [#allocation9], 1
    %2022 = vsyncpa [#allocation4], 1

</llo_original>
